<compile_context>
chip_gen: v7x
topology: tpu7x:2x2x1
jax: 0.10.0
libtpu: 0.0.40
codegen_flags: <defaults>
</compile_context>

<pallas_src>
import functools

import jax
import jax.numpy as jnp
from jax import lax
from jax.experimental import pallas as pl
from jax.experimental.pallas import tpu as pltpu

FEAT_DIM = 512
PROJ_DIM = 128
DROPOUT_P = 0.1
BN_EPS = 1e-5
TILE_K = 512  # contraction tile for the encoder matmul (multiple of 128)


def simclr_kernel(b_actual,
                  x_ref, wenc_ref, benc_ref,          # encoder stand-in
                  w1_ref, b1_ref,                     # projection Linear(512,512)
                  gamma_ref, beta_ref,                # BatchNorm1d(512) affine
                  w2_ref, b2_ref,                     # projection Linear(512, proj_dim)
                  drop_ref,                           # pre-scaled dropout keep mask
                  feat_ref, proj_ref,                 # outputs
                  acc_ref):                           # f32 VMEM accumulator
    k = pl.program_id(0)

    # ---- encoder (stand-in), K-tiled: acc += x_tile @ Wenc_tile (bf16 in, f32 acc) ----
    @pl.when(k == 0)
    def _():
        acc_ref[...] = jnp.zeros_like(acc_ref)

    acc_ref[...] += jnp.dot(x_ref[...], wenc_ref[...],
                            preferred_element_type=jnp.float32)

    # ---- finalize: bias, write features, run projection head on the full batch ----
    @pl.when(k == pl.num_programs(0) - 1)
    def _():
        feats = acc_ref[...] + benc_ref[...]
        feat_ref[...] = feats.astype(feat_ref.dtype)

        # Linear(512, 512)
        h = jnp.dot(feats.astype(jnp.bfloat16), w1_ref[...],
                    preferred_element_type=jnp.float32) + b1_ref[...]

        # BatchNorm1d(512) -- training-mode batch stats over the REAL batch only
        # (padded rows masked out of mean/var).
        rows = lax.broadcasted_iota(jnp.int32, (h.shape[0], 1), 0)
        row_mask = (rows < b_actual).astype(jnp.float32)
        inv_n = jnp.float32(1.0 / b_actual)
        mean = jnp.sum(h * row_mask, axis=0, keepdims=True) * inv_n
        cent = (h - mean) * row_mask
        var = jnp.sum(cent * cent, axis=0, keepdims=True) * inv_n
        h = (h - mean) * lax.rsqrt(var + BN_EPS)
        h = h * gamma_ref[...] + beta_ref[...]

        # ReLU
        h = jnp.maximum(h, 0.0)

        # Dropout(p=0.1), training mode: precomputed keep mask already scaled by 1/(1-p)
        h = h * drop_ref[...]

        # Linear(512, proj_dim)
        proj_ref[...] = (jnp.dot(h.astype(jnp.bfloat16), w2_ref[...],
                                 preferred_element_type=jnp.float32)
                         + b2_ref[...]).astype(proj_ref.dtype)


def simclr_forward(x, params, dropout_key):
    """x: [B, C, H, W] float32. Returns (features [B, 512], projections [B, PROJ_DIM])."""
    B = x.shape[0]
    x_flat = x.reshape(B, -1).astype(jnp.float32)
    chw = x_flat.shape[1]

    wenc, benc, w1, b1, gamma, beta, w2, b2 = params

    # Pad batch to a sublane multiple and the contraction dim to a tile multiple.
    b_pad = max(8, ((B + 7) // 8) * 8)
    chw_pad = ((chw + TILE_K - 1) // TILE_K) * TILE_K
    n_k = chw_pad // TILE_K

    x_p = jnp.zeros((b_pad, chw_pad), jnp.bfloat16)
    x_p = x_p.at[:B, :chw].set(x_flat.astype(jnp.bfloat16))
    wenc_p = jnp.zeros((chw_pad, FEAT_DIM), jnp.bfloat16)
    wenc_p = wenc_p.at[:chw, :].set(wenc.astype(jnp.bfloat16))
    w1_b = w1.astype(jnp.bfloat16)
    w2_b = w2.astype(jnp.bfloat16)

    # Training-mode dropout keep mask, pre-scaled by 1/(1-p).
    keep = jax.random.bernoulli(dropout_key, 1.0 - DROPOUT_P, (b_pad, FEAT_DIM))
    drop_mask = keep.astype(jnp.float32) * jnp.float32(1.0 / (1.0 - DROPOUT_P))

    in_specs = [
        pl.BlockSpec((b_pad, TILE_K), lambda k: (0, k)),          # x tile
        pl.BlockSpec((TILE_K, FEAT_DIM), lambda k: (k, 0)),       # Wenc tile
        pl.BlockSpec((1, FEAT_DIM), lambda k: (0, 0)),            # benc
        pl.BlockSpec((FEAT_DIM, FEAT_DIM), lambda k: (0, 0)),     # w1
        pl.BlockSpec((1, FEAT_DIM), lambda k: (0, 0)),            # b1
        pl.BlockSpec((1, FEAT_DIM), lambda k: (0, 0)),            # gamma
        pl.BlockSpec((1, FEAT_DIM), lambda k: (0, 0)),            # beta
        pl.BlockSpec((FEAT_DIM, PROJ_DIM), lambda k: (0, 0)),     # w2
        pl.BlockSpec((1, PROJ_DIM), lambda k: (0, 0)),            # b2
        pl.BlockSpec((b_pad, FEAT_DIM), lambda k: (0, 0)),        # dropout mask
    ]
    out_specs = [
        pl.BlockSpec((b_pad, FEAT_DIM), lambda k: (0, 0)),        # features
        pl.BlockSpec((b_pad, PROJ_DIM), lambda k: (0, 0)),        # projections
    ]

    flops = (2 * b_pad * chw_pad * FEAT_DIM
             + 2 * b_pad * FEAT_DIM * FEAT_DIM
             + 2 * b_pad * FEAT_DIM * PROJ_DIM)
    bytes_accessed = (x_p.size * 2 + wenc_p.size * 2 + w1_b.size * 2 + w2_b.size * 2
                      + (benc.size + b1.size + gamma.size + beta.size + b2.size
                         + drop_mask.size) * 4
                      + b_pad * FEAT_DIM * 4 + b_pad * PROJ_DIM * 4)
    cost = pl.CostEstimate(flops=flops, transcendentals=FEAT_DIM,
                           bytes_accessed=bytes_accessed)

    feats_pad, projs_pad = pl.pallas_call(
        functools.partial(simclr_kernel, B),
        grid=(n_k,),
        in_specs=in_specs,
        out_specs=out_specs,
        out_shape=(
            jax.ShapeDtypeStruct((b_pad, FEAT_DIM), jnp.float32),
            jax.ShapeDtypeStruct((b_pad, PROJ_DIM), jnp.float32),
        ),
        scratch_shapes=[pltpu.VMEM((b_pad, FEAT_DIM), jnp.float32)],
        compiler_params=pltpu.CompilerParams(
            dimension_semantics=("arbitrary",),
            vmem_limit_bytes=48 * 1024 * 1024),
        cost_estimate=cost,
    )(x_p, wenc_p, benc, w1_b, b1, gamma, beta, w2_b, b2, drop_mask)

    return feats_pad[:B], projs_pad[:B]


def init_params(key, in_dim):
    """Deterministic PyTorch-style (uniform +/- 1/sqrt(fan_in)) init, f32 masters."""
    ks = jax.random.split(key, 6)

    def lin(kw, kb, fan_in, fan_out):
        bound = 1.0 / jnp.sqrt(fan_in)
        w = jax.random.uniform(kw, (fan_in, fan_out), jnp.float32, -bound, bound)
        b = jax.random.uniform(kb, (1, fan_out), jnp.float32, -bound, bound)
        return w, b

    wenc, benc = lin(ks[0], ks[1], in_dim, FEAT_DIM)
    w1, b1 = lin(ks[2], ks[3], FEAT_DIM, FEAT_DIM)
    w2, b2 = lin(ks[4], ks[5], FEAT_DIM, PROJ_DIM)
    gamma = jnp.ones((1, FEAT_DIM), jnp.float32)   # BatchNorm1d weight
    beta = jnp.zeros((1, FEAT_DIM), jnp.float32)   # BatchNorm1d bias
    return (wenc, benc, w1, b1, gamma, beta, w2, b2)


if __name__ == "__main__":
    key = jax.random.PRNGKey(0)
    k_x, k_p, k_drop = jax.random.split(key, 3)

    B, C, H, W = 2, 4, 16, 16          # small NCHW input
    x = jax.random.normal(k_x, (B, C, H, W), jnp.float32)
    params = init_params(k_p, C * H * W)

    feats, projs = simclr_forward(x, params, k_drop)
    jax.block_until_ready((feats, projs))

    assert feats.shape == (B, FEAT_DIM)
    assert projs.shape == (B, PROJ_DIM)
    assert bool(jnp.isfinite(feats).all()) and bool(jnp.isfinite(projs).all())
    print("KERNEL_OK")
</pallas_src>

<mosaic_0001>
module attributes {stable_mosaic.version = 11 : i64} {
  func.func @simclr_kernel(%arg0: i32, %arg1: memref<8x512xbf16, #tpu.memory_space<vmem>>, %arg2: memref<512x512xbf16, #tpu.memory_space<vmem>>, %arg3: memref<1x512xf32, #tpu.memory_space<vmem>>, %arg4: memref<512x512xbf16, #tpu.memory_space<vmem>>, %arg5: memref<1x512xf32, #tpu.memory_space<vmem>>, %arg6: memref<1x512xf32, #tpu.memory_space<vmem>>, %arg7: memref<1x512xf32, #tpu.memory_space<vmem>>, %arg8: memref<512x128xbf16, #tpu.memory_space<vmem>>, %arg9: memref<1x128xf32, #tpu.memory_space<vmem>>, %arg10: memref<8x512xf32, #tpu.memory_space<vmem>>, %arg11: memref<8x512xf32, #tpu.memory_space<vmem>>, %arg12: memref<8x128xf32, #tpu.memory_space<vmem>>, %arg13: memref<8x512xf32, #tpu.memory_space<vmem>>) attributes {dimension_semantics = [#tpu.dimension_semantics<arbitrary>], iteration_bounds = array<i64: 2>, scalar_prefetch = 0 : i64, scratch_operands = 1 : i64, tpu.core_type = #tpu.core_type<tc>, window_params = [{transform_indices = @transform_0, window_bounds = array<i64: 8, 512>}, {transform_indices = @transform_1, window_bounds = array<i64: 512, 512>}, {pipeline_mode = #tpu.pipeline_mode<synchronous>, transform_indices = @transform_2, window_bounds = array<i64: 1, 512>}, {pipeline_mode = #tpu.pipeline_mode<synchronous>, transform_indices = @transform_3, window_bounds = array<i64: 512, 512>}, {pipeline_mode = #tpu.pipeline_mode<synchronous>, transform_indices = @transform_4, window_bounds = array<i64: 1, 512>}, {pipeline_mode = #tpu.pipeline_mode<synchronous>, transform_indices = @transform_5, window_bounds = array<i64: 1, 512>}, {pipeline_mode = #tpu.pipeline_mode<synchronous>, transform_indices = @transform_6, window_bounds = array<i64: 1, 512>}, {pipeline_mode = #tpu.pipeline_mode<synchronous>, transform_indices = @transform_7, window_bounds = array<i64: 512, 128>}, {pipeline_mode = #tpu.pipeline_mode<synchronous>, transform_indices = @transform_8, window_bounds = array<i64: 1, 128>}, {pipeline_mode = #tpu.pipeline_mode<synchronous>, transform_indices = @transform_9, window_bounds = array<i64: 8, 512>}, {pipeline_mode = #tpu.pipeline_mode<synchronous>, transform_indices = @transform_10, window_bounds = array<i64: 8, 512>}, {pipeline_mode = #tpu.pipeline_mode<synchronous>, transform_indices = @transform_11, window_bounds = array<i64: 8, 128>}]} {
    %c0_i32 = arith.constant 0 : i32
    %0 = arith.cmpi eq, %arg0, %c0_i32 : i32
    %1 = arith.extui %0 : i1 to i32
    %c0_i32_0 = arith.constant 0 : i32
    %2 = arith.cmpi ne, %1, %c0_i32_0 : i32
    scf.if %2 {
      %cst_9 = arith.constant 0.000000e+00 : f32
      %12 = vector.broadcast %cst_9 : f32 to vector<8x512xf32>
      %c0_10 = arith.constant 0 : index
      %c0_11 = arith.constant 0 : index
      %13 = vector.load %arg13[%c0_10, %c0_11] : memref<8x512xf32, #tpu.memory_space<vmem>>, vector<8x512xf32>
      tpu.vector_store %arg13[%c0_10, %c0_11], %12 {strides = array<i32>} : memref<8x512xf32, #tpu.memory_space<vmem>>, vector<8x512xf32>,
    } else {
    }
    %c0 = arith.constant 0 : index
    %c0_1 = arith.constant 0 : index
    %3 = vector.load %arg13[%c0, %c0_1] : memref<8x512xf32, #tpu.memory_space<vmem>>, vector<8x512xf32>
    %c0_2 = arith.constant 0 : index
    %c0_3 = arith.constant 0 : index
    %4 = vector.load %arg1[%c0_2, %c0_3] : memref<8x512xbf16, #tpu.memory_space<vmem>>, vector<8x512xbf16>
    %c0_4 = arith.constant 0 : index
    %c0_5 = arith.constant 0 : index
    %5 = vector.load %arg2[%c0_4, %c0_5] : memref<512x512xbf16, #tpu.memory_space<vmem>>, vector<512x512xbf16>
    %cst = arith.constant dense<0.000000e+00> : vector<8x512xf32>
    %6 = tpu.matmul %4, %5, %cst {dimension_numbers = #tpu.dot_dimension_numbers<[1], [0], [0], [1], [0, 0, 1, 1], [], []>} : vector<8x512xbf16>, vector<512x512xbf16>, vector<8x512xf32> -> vector<8x512xf32>
    %7 = arith.addf %3, %6 : vector<8x512xf32>
    %c0_6 = arith.constant 0 : index
    %c0_7 = arith.constant 0 : index
    %8 = vector.load %arg13[%c0_6, %c0_7] : memref<8x512xf32, #tpu.memory_space<vmem>>, vector<8x512xf32>
    tpu.vector_store %arg13[%c0_6, %c0_7], %7 {strides = array<i32>} : memref<8x512xf32, #tpu.memory_space<vmem>>, vector<8x512xf32>,
    %c1_i32 = arith.constant 1 : i32
    %9 = arith.cmpi eq, %arg0, %c1_i32 : i32
    %10 = arith.extui %9 : i1 to i32
    %c0_i32_8 = arith.constant 0 : i32
    %11 = arith.cmpi ne, %10, %c0_i32_8 : i32
    scf.if %11 {
      %c0_9 = arith.constant 0 : index
      %c0_10 = arith.constant 0 : index
      %12 = vector.load %arg13[%c0_9, %c0_10] : memref<8x512xf32, #tpu.memory_space<vmem>>, vector<8x512xf32>
      %c0_11 = arith.constant 0 : index
      %c0_12 = arith.constant 0 : index
      %13 = vector.load %arg3[%c0_11, %c0_12] : memref<1x512xf32, #tpu.memory_space<vmem>>, vector<1x512xf32>
      %14 = vector.broadcast %13 : vector<1x512xf32> to vector<8x512xf32>
      %15 = arith.addf %12, %14 : vector<8x512xf32>
      %c0_13 = arith.constant 0 : index
      %c0_14 = arith.constant 0 : index
      %16 = vector.load %arg11[%c0_13, %c0_14] : memref<8x512xf32, #tpu.memory_space<vmem>>, vector<8x512xf32>
      tpu.vector_store %arg11[%c0_13, %c0_14], %15 {strides = array<i32>} : memref<8x512xf32, #tpu.memory_space<vmem>>, vector<8x512xf32>,
      %17 = arith.truncf %15 : vector<8x512xf32> to vector<8x512xbf16>
      %c0_15 = arith.constant 0 : index
      %c0_16 = arith.constant 0 : index
      %18 = vector.load %arg4[%c0_15, %c0_16] : memref<512x512xbf16, #tpu.memory_space<vmem>>, vector<512x512xbf16>
      %cst_17 = arith.constant dense<0.000000e+00> : vector<8x512xf32>
      %19 = tpu.matmul %17, %18, %cst_17 {dimension_numbers = #tpu.dot_dimension_numbers<[1], [0], [0], [1], [0, 0, 1, 1], [], []>} : vector<8x512xbf16>, vector<512x512xbf16>, vector<8x512xf32> -> vector<8x512xf32>
      %c0_18 = arith.constant 0 : index
      %c0_19 = arith.constant 0 : index
      %20 = vector.load %arg5[%c0_18, %c0_19] : memref<1x512xf32, #tpu.memory_space<vmem>>, vector<1x512xf32>
      %21 = vector.broadcast %20 : vector<1x512xf32> to vector<8x512xf32>
      %22 = arith.addf %19, %21 : vector<8x512xf32>
      %23 = tpu.iota {dimensions = array<i32: 0>} : vector<8x1xi32>
      %c2_i32 = arith.constant 2 : i32
      %24 = vector.broadcast %c2_i32 : i32 to vector<8x1xi32>
      %25 = arith.cmpi slt, %23, %24 : vector<8x1xi32>
      %26 = arith.extui %25 : vector<8x1xi1> to vector<8x1xi32>
      %27 = arith.sitofp %26 : vector<8x1xi32> to vector<8x1xf32>
      %28 = vector.broadcast %27 : vector<8x1xf32> to vector<8x512xf32>
      %29 = arith.mulf %22, %28 : vector<8x512xf32>
      %cst_20 = arith.constant dense<0.000000e+00> : vector<512xf32>
      %30 = vector.multi_reduction <add>, %29, %cst_20 [0] : vector<8x512xf32> to vector<512xf32>
      %31 = vector.shape_cast %30 : vector<512xf32> to vector<1x512xf32>
      %cst_21 = arith.constant 5.000000e-01 : f32
      %32 = vector.broadcast %cst_21 : f32 to vector<1x512xf32>
      %33 = arith.mulf %31, %32 : vector<1x512xf32>
      %34 = vector.broadcast %33 : vector<1x512xf32> to vector<8x512xf32>
      %35 = arith.subf %22, %34 : vector<8x512xf32>
      %36 = vector.broadcast %27 : vector<8x1xf32> to vector<8x512xf32>
      %37 = arith.mulf %35, %36 : vector<8x512xf32>
      %38 = arith.mulf %37, %37 : vector<8x512xf32>
      %cst_22 = arith.constant dense<0.000000e+00> : vector<512xf32>
      %39 = vector.multi_reduction <add>, %38, %cst_22 [0] : vector<8x512xf32> to vector<512xf32>
      %40 = vector.shape_cast %39 : vector<512xf32> to vector<1x512xf32>
      %cst_23 = arith.constant 5.000000e-01 : f32
      %41 = vector.broadcast %cst_23 : f32 to vector<1x512xf32>
      %42 = arith.mulf %40, %41 : vector<1x512xf32>
      %43 = vector.broadcast %33 : vector<1x512xf32> to vector<8x512xf32>
      %44 = arith.subf %22, %43 : vector<8x512xf32>
      %cst_24 = arith.constant 9.99999974E-6 : f32
      %45 = vector.broadcast %cst_24 : f32 to vector<1x512xf32>
      %46 = arith.addf %42, %45 : vector<1x512xf32>
      %47 = math.rsqrt %46 : vector<1x512xf32>
      %48 = vector.broadcast %47 : vector<1x512xf32> to vector<8x512xf32>
      %49 = arith.mulf %44, %48 : vector<8x512xf32>
      %c0_25 = arith.constant 0 : index
      %c0_26 = arith.constant 0 : index
      %50 = vector.load %arg6[%c0_25, %c0_26] : memref<1x512xf32, #tpu.memory_space<vmem>>, vector<1x512xf32>
      %51 = vector.broadcast %50 : vector<1x512xf32> to vector<8x512xf32>
      %52 = arith.mulf %49, %51 : vector<8x512xf32>
      %c0_27 = arith.constant 0 : index
      %c0_28 = arith.constant 0 : index
      %53 = vector.load %arg7[%c0_27, %c0_28] : memref<1x512xf32, #tpu.memory_space<vmem>>, vector<1x512xf32>
      %54 = vector.broadcast %53 : vector<1x512xf32> to vector<8x512xf32>
      %55 = arith.addf %52, %54 : vector<8x512xf32>
      %cst_29 = arith.constant 0.000000e+00 : f32
      %56 = vector.broadcast %cst_29 : f32 to vector<8x512xf32>
      %57 = arith.maximumf %55, %56 : vector<8x512xf32>
      %c0_30 = arith.constant 0 : index
      %c0_31 = arith.constant 0 : index
      %58 = vector.load %arg10[%c0_30, %c0_31] : memref<8x512xf32, #tpu.memory_space<vmem>>, vector<8x512xf32>
      %59 = arith.mulf %57, %58 : vector<8x512xf32>
      %60 = arith.truncf %59 : vector<8x512xf32> to vector<8x512xbf16>
      %c0_32 = arith.constant 0 : index
      %c0_33 = arith.constant 0 : index
      %61 = vector.load %arg8[%c0_32, %c0_33] : memref<512x128xbf16, #tpu.memory_space<vmem>>, vector<512x128xbf16>
      %cst_34 = arith.constant dense<0.000000e+00> : vector<8x128xf32>
      %62 = tpu.matmul %60, %61, %cst_34 {dimension_numbers = #tpu.dot_dimension_numbers<[1], [0], [0], [1], [0, 0, 1, 1], [], []>} : vector<8x512xbf16>, vector<512x128xbf16>, vector<8x128xf32> -> vector<8x128xf32>
      %c0_35 = arith.constant 0 : index
      %c0_36 = arith.constant 0 : index
      %63 = vector.load %arg9[%c0_35, %c0_36] : memref<1x128xf32, #tpu.memory_space<vmem>>, vector<1x128xf32>
      %64 = vector.broadcast %63 : vector<1x128xf32> to vector<8x128xf32>
      %65 = arith.addf %62, %64 : vector<8x128xf32>
      %c0_37 = arith.constant 0 : index
      %c0_38 = arith.constant 0 : index
      %66 = vector.load %arg12[%c0_37, %c0_38] : memref<8x128xf32, #tpu.memory_space<vmem>>, vector<8x128xf32>
      tpu.vector_store %arg12[%c0_37, %c0_38], %65 {strides = array<i32>} : memref<8x128xf32, #tpu.memory_space<vmem>>, vector<8x128xf32>,
    } else {
    }
    return
  }
  func.func @transform_0(%arg0: i32) -> (i32, i32) {
    %c0_i32 = arith.constant 0 : i32
    %c0_i32_0 = arith.constant 0 : i32
    return %c0_i32, %arg0 : i32, i32
  }
  func.func @transform_1(%arg0: i32) -> (i32, i32) {
    %c0_i32 = arith.constant 0 : i32
    %c0_i32_0 = arith.constant 0 : i32
    return %arg0, %c0_i32 : i32, i32
  }
  func.func @transform_2(%arg0: i32) -> (i32, i32) {
    %c0_i32 = arith.constant 0 : i32
    %c0_i32_0 = arith.constant 0 : i32
    %c0_i32_1 = arith.constant 0 : i32
    return %c0_i32, %c0_i32_0 : i32, i32
  }
  func.func @transform_3(%arg0: i32) -> (i32, i32) {
    %c0_i32 = arith.constant 0 : i32
    %c0_i32_0 = arith.constant 0 : i32
    %c0_i32_1 = arith.constant 0 : i32
    return %c0_i32, %c0_i32_0 : i32, i32
  }
  func.func @transform_4(%arg0: i32) -> (i32, i32) {
    %c0_i32 = arith.constant 0 : i32
    %c0_i32_0 = arith.constant 0 : i32
    %c0_i32_1 = arith.constant 0 : i32
    return %c0_i32, %c0_i32_0 : i32, i32
  }
  func.func @transform_5(%arg0: i32) -> (i32, i32) {
    %c0_i32 = arith.constant 0 : i32
    %c0_i32_0 = arith.constant 0 : i32
    %c0_i32_1 = arith.constant 0 : i32
    return %c0_i32, %c0_i32_0 : i32, i32
  }
  func.func @transform_6(%arg0: i32) -> (i32, i32) {
    %c0_i32 = arith.constant 0 : i32
    %c0_i32_0 = arith.constant 0 : i32
    %c0_i32_1 = arith.constant 0 : i32
    return %c0_i32, %c0_i32_0 : i32, i32
  }
  func.func @transform_7(%arg0: i32) -> (i32, i32) {
    %c0_i32 = arith.constant 0 : i32
    %c0_i32_0 = arith.constant 0 : i32
    %c0_i32_1 = arith.constant 0 : i32
    return %c0_i32, %c0_i32_0 : i32, i32
  }
  func.func @transform_8(%arg0: i32) -> (i32, i32) {
    %c0_i32 = arith.constant 0 : i32
    %c0_i32_0 = arith.constant 0 : i32
    %c0_i32_1 = arith.constant 0 : i32
    return %c0_i32, %c0_i32_0 : i32, i32
  }
  func.func @transform_9(%arg0: i32) -> (i32, i32) {
    %c0_i32 = arith.constant 0 : i32
    %c0_i32_0 = arith.constant 0 : i32
    %c0_i32_1 = arith.constant 0 : i32
    return %c0_i32, %c0_i32_0 : i32, i32
  }
  func.func @transform_10(%arg0: i32) -> (i32, i32) {
    %c0_i32 = arith.constant 0 : i32
    %c0_i32_0 = arith.constant 0 : i32
    %c0_i32_1 = arith.constant 0 : i32
    return %c0_i32, %c0_i32_0 : i32, i32
  }
  func.func @transform_11(%arg0: i32) -> (i32, i32) {
    %c0_i32 = arith.constant 0 : i32
    %c0_i32_0 = arith.constant 0 : i32
    %c0_i32_1 = arith.constant 0 : i32
    return %c0_i32, %c0_i32_0 : i32, i32
  }
}

</mosaic_0001>

<llo_original>
// kernel: tpu_custom_call.1
$region0: #{tpu_custom_call.1}
  #allocation0 [shape = 'u32[]', space=smem, size = 0x4, offset = 0x4, fixed_abs, tag = 'smem constant byte address 0x4 - core index']
  #allocation1 [shape = 'u32[144,128]{1,0:T(1,128)}', space=vmem, size = 0x12000, scoped, tag = 'internal scratch']
  #allocation2 [shape = 'f32[8,512]{1,0:T(8,128)}', space=vmem, size = 0x4000, scoped, tag = 'scratch operand']
  %s0 = inlined_call_operand.hbm [shape: bf16[8,1024], index: 0, kind: input, shape index: {}]
  %s1 = inlined_call_operand.hbm [shape: bf16[1024,512], index: 1, kind: input, shape index: {}]
  %s2 = inlined_call_operand.hbm [shape: f32[1,512], index: 2, kind: input, shape index: {}]
  %s3 = inlined_call_operand.hbm [shape: bf16[512,512], index: 3, kind: input, shape index: {}]
  %s4 = inlined_call_operand.hbm [shape: f32[1,512], index: 4, kind: input, shape index: {}]
  %s5 = inlined_call_operand.hbm [shape: f32[1,512], index: 5, kind: input, shape index: {}]
  %s6 = inlined_call_operand.hbm [shape: f32[1,512], index: 6, kind: input, shape index: {}]
  %s7 = inlined_call_operand.hbm [shape: bf16[512,128], index: 7, kind: input, shape index: {}]
  %s8 = inlined_call_operand.vmem [shape: f32[1,128], index: 8, kind: input, shape index: {}]
  %s9 = inlined_call_operand.vmem [shape: f32[8,512], index: 9, kind: input, shape index: {}]
  %s10 = inlined_call_operand.hbm [shape: f32[8,512], index: 10, kind: output, shape index: {0}]
  %s11 = inlined_call_operand.hbm [shape: f32[8,128], index: 11, kind: output, shape index: {1}]
  %12 = xla_tuple %s10, %s11
  %s13 = sld [smem:[#allocation0]]
  $region121: #{tpu_custom_call.1} parent=0
    _
  %s15 = ssub.s32 1, %s13
  %s16 = scalar_select 0, %s15, %s13
  $region1: #{tpu_custom_call.1} parent=0
    #allocation3 [shape = 'u8[16384]{0}', space=vmem, size = 0x4000, scoped, tag = 'input window, operand 0']
    #allocation4 [shape = 's32[2]{0}', space=sflag, size = 0x8, scoped, tag = 'scoped memory for tpu_custom_call.1']
    #allocation5 [shape = 's32[2]{0}', space=sflag, size = 0x8, scoped, tag = 'scoped memory for tpu_custom_call.1']
    #allocation6 [shape = 'u8[1048576]{0}', space=vmem, size = 0x100000, scoped, tag = 'input window, operand 1']
    #allocation7 [shape = 's32[2]{0}', space=sflag, size = 0x8, scoped, tag = 'scoped memory for tpu_custom_call.1']
    #allocation8 [shape = 'u8[2048]{0}', space=vmem, size = 0x800, scoped, tag = 'input window, operand 2, single buffered']
    #allocation9 [shape = 'u8[524288]{0}', space=vmem, size = 0x80000, scoped, tag = 'input window, operand 3, single buffered']
    #allocation10 [shape = 's32[1]{0}', space=sflag, size = 0x4, scoped, tag = 'scoped memory for tpu_custom_call.1']
    #allocation11 [shape = 'u8[2048]{0}', space=vmem, size = 0x800, scoped, tag = 'input window, operand 4, single buffered']
    #allocation12 [shape = 'u8[2048]{0}', space=vmem, size = 0x800, scoped, tag = 'input window, operand 5, single buffered']
    #allocation13 [shape = 's32[1]{0}', space=sflag, size = 0x4, scoped, tag = 'scoped memory for tpu_custom_call.1']
    #allocation14 [shape = 'u8[2048]{0}', space=vmem, size = 0x800, scoped, tag = 'input window, operand 6, single buffered']
    #allocation15 [shape = 'u8[131072]{0}', space=vmem, size = 0x20000, scoped, tag = 'input window, operand 7, single buffered']
    #allocation16 [shape = 's32[1]{0}', space=sflag, size = 0x4, scoped, tag = 'scoped memory for tpu_custom_call.1']
    #allocation17 [shape = 'u8[16384]{0}', space=vmem, size = 0x4000, scoped, tag = 'output window, operand 0, single buffered']
    #allocation18 [shape = 'u8[4096]{0}', space=vmem, size = 0x1000, scoped, tag = 'output window, operand 1, single buffered']
    #allocation19 [shape = 's32[1]{0}', space=sflag, size = 0x4, scoped, tag = 'scoped memory for tpu_custom_call.1']
    %17 = vsyncpa [#allocation4], 0
    %s18 = scalar_lea.sflag [#allocation4], 1
    %19 = vsyncpa %s18, 0
    %20 = vsyncpa [#allocation7], 0
    %s21 = scalar_lea.sflag [#allocation7], 1
    %22 = vsyncpa %s21, 0
    %23 = vsyncpa [#allocation10], 0
    %24 = vsyncpa [#allocation13], 0
    %25 = vsyncpa [#allocation16], 0
    %26 = vsyncpa [#allocation5], 0
    %27 = vsyncpa [#allocation19], 0
    loop: start=0, step=1, limit=4
    $region2: #{tpu_custom_call.1} parent=1 // loop_pre_header
      _
    $region3: #{tpu_custom_call.1} parent=1 // loop_header
      %s29 = sphi 0, %s33
      %p30 = scmp.ge.s32.totalorder %s29, 4
      %s39 = sphi 0, %s41
      %s42 = sphi 0, %s39
      %s43 = sphi 0, %s42
      %s59 = sphi 0, %s43
      %s65 = sphi 0, %s67
      %s68 = sphi 0, %s65
      %s69 = sphi 0, %s68
      %s85 = sphi 0, %s69
      %s89 = sphi 0, %s89
      %s91 = sphi 0, %s89
      %s92 = sphi 0, %s91
      %s106 = sphi 0, %s92
      %s110 = sphi 0, %s110
      %s112 = sphi 0, %s110
      %s113 = sphi 0, %s112
      %s127 = sphi 0, %s113
      %s131 = sphi 0, %s131
      %s133 = sphi 0, %s131
      %s134 = sphi 0, %s133
      %s148 = sphi 0, %s134
      %s152 = sphi 0, %s152
      %s154 = sphi 0, %s152
      %s155 = sphi 0, %s154
      %s169 = sphi 0, %s155
      %s173 = sphi 0, %s173
      %s175 = sphi 0, %s173
      %s176 = sphi 0, %s175
      %s190 = sphi 0, %s176
      %s194 = sphi 0, %s194
      %s196 = sphi 0, %s194
      %s197 = sphi 0, %s196
      %s211 = sphi 0, %s197
      %s215 = sphi 0, %s215
      %s217 = sphi 0, %s215
      %s218 = sphi 0, %s217
      %s232 = sphi 0, %s218
      %s236 = sphi 0, %s236
      %s238 = sphi 0, %s236
      %s239 = sphi 0, %s238
      %s253 = sphi 0, %s239
      %s257 = sphi 0, %s257
      %s259 = sphi 0, %s257
      %s260 = sphi 0, %s259
      %s274 = sphi 0, %s260
      %s278 = sphi 0, %s278
      %s280 = sphi 0, %s278
      %s281 = sphi 0, %s280
      %s295 = sphi 0, %s281
    $region4: #{tpu_custom_call.1} parent=1 // loop_header_branch
      %32 = sbr.rel (%p30) target = $region8
    $region5: #{tpu_custom_call.1} parent=1 // loop_body
      %s34 = ssub.s32 %s29, 1
      %s35 = ssub.s32 %s29, 2
      %s36 = sadd.s32 %s29, 1
      %s37 = ssub.s32 %s29, %s36
      %p38 = scmp.eq.s32.totalorder %s37, 0
      %s40 = sadd.s32 %s39, 1
      %s41 = scalar_select %p38, %s39, %s40
      %p44 = pneg %p38
      %p45 = scmp.eq.s32.totalorder %s29, 1
      %p46 = por %p44, %p45
      %p47 = scmp.ne.s32.totalorder %s39, %s42
      %p48 = scmp.eq.s32.totalorder %s29, 0
      %p49 = por %p47, %p48
      %p50 = scmp.ne.s32.totalorder %s39, %s42
      %p51 = scmp.eq.s32.totalorder %s34, 1
      %p52 = por %p50, %p51
      %p53 = scmp.ne.s32.totalorder %s42, %s43
      %p54 = scmp.eq.s32.totalorder %s34, 0
      %p55 = por %p53, %p54
      %p56 = scmp.ne.s32.totalorder %s42, %s43
      %p57 = scmp.eq.s32.totalorder %s35, 1
      %p58 = por %p56, %p57
      %p60 = scmp.ne.s32.totalorder %s43, %s59
      %p61 = scmp.eq.s32.totalorder %s35, 0
      %p62 = por %p60, %p61
      %s63 = ssub.s32 %s29, %s36
      %p64 = scmp.eq.s32.totalorder %s63, 0
      %s66 = sadd.s32 %s65, 1
      %s67 = scalar_select %p64, %s65, %s66
      %p70 = pneg %p64
      %p71 = scmp.eq.s32.totalorder %s29, 1
      %p72 = por %p70, %p71
      %p73 = scmp.ne.s32.totalorder %s65, %s68
      %p74 = scmp.eq.s32.totalorder %s29, 0
      %p75 = por %p73, %p74
      %p76 = scmp.ne.s32.totalorder %s65, %s68
      %p77 = scmp.eq.s32.totalorder %s34, 1
      %p78 = por %p76, %p77
      %p79 = scmp.ne.s32.totalorder %s68, %s69
      %p80 = scmp.eq.s32.totalorder %s34, 0
      %p81 = por %p79, %p80
      %p82 = scmp.ne.s32.totalorder %s68, %s69
      %p83 = scmp.eq.s32.totalorder %s35, 1
      %p84 = por %p82, %p83
      %p86 = scmp.ne.s32.totalorder %s69, %s85
      %p87 = scmp.eq.s32.totalorder %s35, 0
      %p88 = por %p86, %p87
      %s90 = sadd.s32 %s89, 1
      %p93 = scmp.eq.s32.totalorder %s29, 1
      %p94 = scmp.ne.s32.totalorder %s89, %s91
      %p95 = scmp.eq.s32.totalorder %s29, 0
      %p96 = por %p94, %p95
      %p97 = scmp.ne.s32.totalorder %s89, %s91
      %p98 = scmp.eq.s32.totalorder %s34, 1
      %p99 = por %p97, %p98
      %p100 = scmp.ne.s32.totalorder %s91, %s92
      %p101 = scmp.eq.s32.totalorder %s34, 0
      %p102 = por %p100, %p101
      %p103 = scmp.ne.s32.totalorder %s91, %s92
      %p104 = scmp.eq.s32.totalorder %s35, 1
      %p105 = por %p103, %p104
      %p107 = scmp.ne.s32.totalorder %s92, %s106
      %p108 = scmp.eq.s32.totalorder %s35, 0
      %p109 = por %p107, %p108
      %s111 = sadd.s32 %s110, 1
      %p114 = scmp.eq.s32.totalorder %s29, 1
      %p115 = scmp.ne.s32.totalorder %s110, %s112
      %p116 = scmp.eq.s32.totalorder %s29, 0
      %p117 = por %p115, %p116
      %p118 = scmp.ne.s32.totalorder %s110, %s112
      %p119 = scmp.eq.s32.totalorder %s34, 1
      %p120 = por %p118, %p119
      %p121 = scmp.ne.s32.totalorder %s112, %s113
      %p122 = scmp.eq.s32.totalorder %s34, 0
      %p123 = por %p121, %p122
      %p124 = scmp.ne.s32.totalorder %s112, %s113
      %p125 = scmp.eq.s32.totalorder %s35, 1
      %p126 = por %p124, %p125
      %p128 = scmp.ne.s32.totalorder %s113, %s127
      %p129 = scmp.eq.s32.totalorder %s35, 0
      %p130 = por %p128, %p129
      %s132 = sadd.s32 %s131, 1
      %p135 = scmp.eq.s32.totalorder %s29, 1
      %p136 = scmp.ne.s32.totalorder %s131, %s133
      %p137 = scmp.eq.s32.totalorder %s29, 0
      %p138 = por %p136, %p137
      %p139 = scmp.ne.s32.totalorder %s131, %s133
      %p140 = scmp.eq.s32.totalorder %s34, 1
      %p141 = por %p139, %p140
      %p142 = scmp.ne.s32.totalorder %s133, %s134
      %p143 = scmp.eq.s32.totalorder %s34, 0
      %p144 = por %p142, %p143
      %p145 = scmp.ne.s32.totalorder %s133, %s134
      %p146 = scmp.eq.s32.totalorder %s35, 1
      %p147 = por %p145, %p146
      %p149 = scmp.ne.s32.totalorder %s134, %s148
      %p150 = scmp.eq.s32.totalorder %s35, 0
      %p151 = por %p149, %p150
      %s153 = sadd.s32 %s152, 1
      %p156 = scmp.eq.s32.totalorder %s29, 1
      %p157 = scmp.ne.s32.totalorder %s152, %s154
      %p158 = scmp.eq.s32.totalorder %s29, 0
      %p159 = por %p157, %p158
      %p160 = scmp.ne.s32.totalorder %s152, %s154
      %p161 = scmp.eq.s32.totalorder %s34, 1
      %p162 = por %p160, %p161
      %p163 = scmp.ne.s32.totalorder %s154, %s155
      %p164 = scmp.eq.s32.totalorder %s34, 0
      %p165 = por %p163, %p164
      %p166 = scmp.ne.s32.totalorder %s154, %s155
      %p167 = scmp.eq.s32.totalorder %s35, 1
      %p168 = por %p166, %p167
      %p170 = scmp.ne.s32.totalorder %s155, %s169
      %p171 = scmp.eq.s32.totalorder %s35, 0
      %p172 = por %p170, %p171
      %s174 = sadd.s32 %s173, 1
      %p177 = scmp.eq.s32.totalorder %s29, 1
      %p178 = scmp.ne.s32.totalorder %s173, %s175
      %p179 = scmp.eq.s32.totalorder %s29, 0
      %p180 = por %p178, %p179
      %p181 = scmp.ne.s32.totalorder %s173, %s175
      %p182 = scmp.eq.s32.totalorder %s34, 1
      %p183 = por %p181, %p182
      %p184 = scmp.ne.s32.totalorder %s175, %s176
      %p185 = scmp.eq.s32.totalorder %s34, 0
      %p186 = por %p184, %p185
      %p187 = scmp.ne.s32.totalorder %s175, %s176
      %p188 = scmp.eq.s32.totalorder %s35, 1
      %p189 = por %p187, %p188
      %p191 = scmp.ne.s32.totalorder %s176, %s190
      %p192 = scmp.eq.s32.totalorder %s35, 0
      %p193 = por %p191, %p192
      %s195 = sadd.s32 %s194, 1
      %p198 = scmp.eq.s32.totalorder %s29, 1
      %p199 = scmp.ne.s32.totalorder %s194, %s196
      %p200 = scmp.eq.s32.totalorder %s29, 0
      %p201 = por %p199, %p200
      %p202 = scmp.ne.s32.totalorder %s194, %s196
      %p203 = scmp.eq.s32.totalorder %s34, 1
      %p204 = por %p202, %p203
      %p205 = scmp.ne.s32.totalorder %s196, %s197
      %p206 = scmp.eq.s32.totalorder %s34, 0
      %p207 = por %p205, %p206
      %p208 = scmp.ne.s32.totalorder %s196, %s197
      %p209 = scmp.eq.s32.totalorder %s35, 1
      %p210 = por %p208, %p209
      %p212 = scmp.ne.s32.totalorder %s197, %s211
      %p213 = scmp.eq.s32.totalorder %s35, 0
      %p214 = por %p212, %p213
      %s216 = sadd.s32 %s215, 1
      %p219 = scmp.eq.s32.totalorder %s29, 1
      %p220 = scmp.ne.s32.totalorder %s215, %s217
      %p221 = scmp.eq.s32.totalorder %s29, 0
      %p222 = por %p220, %p221
      %p223 = scmp.ne.s32.totalorder %s215, %s217
      %p224 = scmp.eq.s32.totalorder %s34, 1
      %p225 = por %p223, %p224
      %p226 = scmp.ne.s32.totalorder %s217, %s218
      %p227 = scmp.eq.s32.totalorder %s34, 0
      %p228 = por %p226, %p227
      %p229 = scmp.ne.s32.totalorder %s217, %s218
      %p230 = scmp.eq.s32.totalorder %s35, 1
      %p231 = por %p229, %p230
      %p233 = scmp.ne.s32.totalorder %s218, %s232
      %p234 = scmp.eq.s32.totalorder %s35, 0
      %p235 = por %p233, %p234
      %s237 = sadd.s32 %s236, 1
      %p240 = scmp.eq.s32.totalorder %s29, 1
      %p241 = scmp.ne.s32.totalorder %s236, %s238
      %p242 = scmp.eq.s32.totalorder %s29, 0
      %p243 = por %p241, %p242
      %p244 = scmp.ne.s32.totalorder %s236, %s238
      %p245 = scmp.eq.s32.totalorder %s34, 1
      %p246 = por %p244, %p245
      %p247 = scmp.ne.s32.totalorder %s238, %s239
      %p248 = scmp.eq.s32.totalorder %s34, 0
      %p249 = por %p247, %p248
      %p250 = scmp.ne.s32.totalorder %s238, %s239
      %p251 = scmp.eq.s32.totalorder %s35, 1
      %p252 = por %p250, %p251
      %p254 = scmp.ne.s32.totalorder %s239, %s253
      %p255 = scmp.eq.s32.totalorder %s35, 0
      %p256 = por %p254, %p255
      %s258 = sadd.s32 %s257, 1
      %p261 = scmp.eq.s32.totalorder %s29, 1
      %p262 = scmp.ne.s32.totalorder %s257, %s259
      %p263 = scmp.eq.s32.totalorder %s29, 0
      %p264 = por %p262, %p263
      %p265 = scmp.ne.s32.totalorder %s257, %s259
      %p266 = scmp.eq.s32.totalorder %s34, 1
      %p267 = por %p265, %p266
      %p268 = scmp.ne.s32.totalorder %s259, %s260
      %p269 = scmp.eq.s32.totalorder %s34, 0
      %p270 = por %p268, %p269
      %p271 = scmp.ne.s32.totalorder %s259, %s260
      %p272 = scmp.eq.s32.totalorder %s35, 1
      %p273 = por %p271, %p272
      %p275 = scmp.ne.s32.totalorder %s260, %s274
      %p276 = scmp.eq.s32.totalorder %s35, 0
      %p277 = por %p275, %p276
      %s279 = sadd.s32 %s278, 1
      %p282 = scmp.eq.s32.totalorder %s29, 1
      %p283 = scmp.ne.s32.totalorder %s278, %s280
      %p284 = scmp.eq.s32.totalorder %s29, 0
      %p285 = por %p283, %p284
      %p286 = scmp.ne.s32.totalorder %s278, %s280
      %p287 = scmp.eq.s32.totalorder %s34, 1
      %p288 = por %p286, %p287
      %p289 = scmp.ne.s32.totalorder %s280, %s281
      %p290 = scmp.eq.s32.totalorder %s34, 0
      %p291 = por %p289, %p290
      %p292 = scmp.ne.s32.totalorder %s280, %s281
      %p293 = scmp.eq.s32.totalorder %s35, 1
      %p294 = por %p292, %p293
      %p296 = scmp.ne.s32.totalorder %s281, %s295
      %p297 = scmp.eq.s32.totalorder %s35, 0
      %p298 = por %p296, %p297
      %p299 = scmp.le.s32.totalorder 1, %s29
      %p300 = scmp.lt.s32.totalorder %s29, 3
      %p301 = pnand %p299, %p300
      %p302 = pneg %p301
      // Predicated region
      $region9: #{tpu_custom_call.1} parent=5 // pred_check
        _
      $region10: #{tpu_custom_call.1} parent=5 // pred_check_branch
        %304 = sbr.rel (%p301) target = $region12
      $region11: #{tpu_custom_call.1} parent=5 // pred_region
        %s305 = ssub.s32 %s29, 1
        // Predicated region
        $region13: #{tpu_custom_call.1} parent=11 // pred_check
          %p306 = pneg %p102
        $region14: #{tpu_custom_call.1} parent=11 // pred_check_branch
          %308 = sbr.rel (%p306) target = $region16
        $region15: #{tpu_custom_call.1} parent=11 // pred_region
          %s310 = ssub.s32 64, 64
          %311 = vsyncadd [#allocation7], %s310
          %s313 = sshll.u32 [#allocation8], 4
          %s314 = int_to_ptr.vmem [resolvable:$true] %s313
          %316 = dma.hbm_to_vmem [thread:$0]  %s2, 64, %s314, [#allocation7]
        $region16: #{tpu_custom_call.1} parent=11 // pred_fallthru
          _
        // Predicated region
        $region17: #{tpu_custom_call.1} parent=11 // pred_check
          %p317 = pneg %p123
        $region18: #{tpu_custom_call.1} parent=11 // pred_check_branch
          %319 = sbr.rel (%p317) target = $region20
        $region19: #{tpu_custom_call.1} parent=11 // pred_region
          %s321 = ssub.s32 16384, 16384
          %322 = vsyncadd [#allocation10], %s321
          %s323 = sshll.u32 [#allocation9], 4
          %s324 = int_to_ptr.vmem [resolvable:$true] %s323
          %329 = dma.hbm_to_vmem [thread:$0]  %s3, 16384, %s324, [#allocation10], 256, 256, 16
        $region20: #{tpu_custom_call.1} parent=11 // pred_fallthru
          _
        // Predicated region
        $region21: #{tpu_custom_call.1} parent=11 // pred_check
          %p330 = pneg %p144
        $region22: #{tpu_custom_call.1} parent=11 // pred_check_branch
          %332 = sbr.rel (%p330) target = $region24
        $region23: #{tpu_custom_call.1} parent=11 // pred_region
          %s334 = ssub.s32 64, 64
          %335 = vsyncadd [#allocation10], %s334
          %s337 = sshll.u32 [#allocation11], 4
          %s338 = int_to_ptr.vmem [resolvable:$true] %s337
          %340 = dma.hbm_to_vmem [thread:$0]  %s4, 64, %s338, [#allocation10]
        $region24: #{tpu_custom_call.1} parent=11 // pred_fallthru
          _
        // Predicated region
        $region25: #{tpu_custom_call.1} parent=11 // pred_check
          %p341 = pneg %p165
        $region26: #{tpu_custom_call.1} parent=11 // pred_check_branch
          %343 = sbr.rel (%p341) target = $region28
        $region27: #{tpu_custom_call.1} parent=11 // pred_region
          %s345 = ssub.s32 64, 64
          %346 = vsyncadd [#allocation13], %s345
          %s348 = sshll.u32 [#allocation12], 4
          %s349 = int_to_ptr.vmem [resolvable:$true] %s348
          %351 = dma.hbm_to_vmem [thread:$0]  %s5, 64, %s349, [#allocation13]
        $region28: #{tpu_custom_call.1} parent=11 // pred_fallthru
          _
        // Predicated region
        $region29: #{tpu_custom_call.1} parent=11 // pred_check
          %p352 = pneg %p186
        $region30: #{tpu_custom_call.1} parent=11 // pred_check_branch
          %354 = sbr.rel (%p352) target = $region32
        $region31: #{tpu_custom_call.1} parent=11 // pred_region
          %s356 = ssub.s32 64, 64
          %357 = vsyncadd [#allocation13], %s356
          %s359 = sshll.u32 [#allocation14], 4
          %s360 = int_to_ptr.vmem [resolvable:$true] %s359
          %362 = dma.hbm_to_vmem [thread:$0]  %s6, 64, %s360, [#allocation13]
        $region32: #{tpu_custom_call.1} parent=11 // pred_fallthru
          _
        // Predicated region
        $region33: #{tpu_custom_call.1} parent=11 // pred_check
          %p363 = pneg %p207
        $region34: #{tpu_custom_call.1} parent=11 // pred_check_branch
          %365 = sbr.rel (%p363) target = $region36
        $region35: #{tpu_custom_call.1} parent=11 // pred_region
          %s367 = ssub.s32 4096, 4096
          %368 = vsyncadd [#allocation16], %s367
          %s369 = sshll.u32 [#allocation15], 4
          %s370 = int_to_ptr.vmem [resolvable:$true] %s369
          %375 = dma.hbm_to_vmem [thread:$0]  %s7, 4096, %s370, [#allocation16], 64, 64, 4
        $region36: #{tpu_custom_call.1} parent=11 // pred_fallthru
          _
        // Predicated region
        $region37: #{tpu_custom_call.1} parent=11 // pred_check
          %p376 = pneg %p228
        $region38: #{tpu_custom_call.1} parent=11 // pred_check_branch
          %378 = sbr.rel (%p376) target = $region40
        $region39: #{tpu_custom_call.1} parent=11 // pred_region
          _
        $region40: #{tpu_custom_call.1} parent=11 // pred_fallthru
          _
        // Predicated region
        $region41: #{tpu_custom_call.1} parent=11 // pred_check
          %p379 = pneg %p249
        $region42: #{tpu_custom_call.1} parent=11 // pred_check_branch
          %381 = sbr.rel (%p379) target = $region44
        $region43: #{tpu_custom_call.1} parent=11 // pred_region
          _
        $region44: #{tpu_custom_call.1} parent=11 // pred_fallthru
          _
      $region12: #{tpu_custom_call.1} parent=5 // pred_fallthru
        _
      %p382 = scmp.lt.s32.totalorder %s29, 2
      // Predicated region
      $region45: #{tpu_custom_call.1} parent=5 // pred_check
        %p383 = pneg %p382
      $region46: #{tpu_custom_call.1} parent=5 // pred_check_branch
        %385 = sbr.rel (%p383) target = $region48
      $region47: #{tpu_custom_call.1} parent=5 // pred_region
        // Predicated region
        $region49: #{tpu_custom_call.1} parent=47 // pred_check
          %p386 = pneg %p49
        $region50: #{tpu_custom_call.1} parent=47 // pred_check_branch
          %388 = sbr.rel (%p386) target = $region52
        $region51: #{tpu_custom_call.1} parent=47 // pred_region
          %s389 = sand.u32 %s39, 1
          %s390 = scalar_lea.sflag [#allocation4], %s389
          %s391 = sand.u32 %s39, 1
          %s392 = smul.addr %s391, 16
          %s393 = scalar_lea.vmem [#allocation3], %s392
          %s394 = smul.u32 4, %s29
          %s396 = ssub.s32 256, 256
          %397 = vsyncadd %s390, %s396
          %s398 = smul.addr %s394, 64
          %s399 = scalar_lea.hbm %s0, %s398
          %s401 = sshll.u32 %s393, 4
          %s402 = int_to_ptr.vmem [resolvable:$true] %s401
          %404 = dma.hbm_to_vmem [thread:$0]  %s399, 256, %s402, %s390
        $region52: #{tpu_custom_call.1} parent=47 // pred_fallthru
          _
        // Predicated region
        $region53: #{tpu_custom_call.1} parent=47 // pred_check
          %p405 = pneg %p75
        $region54: #{tpu_custom_call.1} parent=47 // pred_check_branch
          %407 = sbr.rel (%p405) target = $region56
        $region55: #{tpu_custom_call.1} parent=47 // pred_region
          %s408 = sand.u32 %s29, 1
          %s409 = scalar_lea.sflag [#allocation7], %s408
          %s410 = sand.u32 %s65, 1
          %s411 = smul.addr %s410, 1024
          %s412 = scalar_lea.vmem [#allocation6], %s411
          %s413 = smul.u32 64, %s29
          %s415 = ssub.s32 16384, 16384
          %416 = vsyncadd %s409, %s415
          %s417 = smul.addr %s413, 4
          %s418 = smul.addr %s417, 64
          %s419 = scalar_lea.hbm %s1, %s418
          %s420 = sshll.u32 %s412, 4
          %s421 = int_to_ptr.vmem [resolvable:$true] %s420
          %426 = dma.hbm_to_vmem [thread:$0]  %s419, 16384, %s421, %s409, 256, 256, 16
        $region56: #{tpu_custom_call.1} parent=47 // pred_fallthru
          _
      $region48: #{tpu_custom_call.1} parent=5 // pred_fallthru
        _
      %p427 = scmp.le.s32.totalorder 1, %s29
      %p428 = scmp.lt.s32.totalorder %s29, 3
      %p429 = pnand %p427, %p428
      %p430 = pneg %p429
      // Predicated region
      $region57: #{tpu_custom_call.1} parent=5 // pred_check
        _
      $region58: #{tpu_custom_call.1} parent=5 // pred_check_branch
        %432 = sbr.rel (%p429) target = $region60
      $region59: #{tpu_custom_call.1} parent=5 // pred_region
        %s433 = ssub.s32 %s29, 1
        %s434 = sand.u32 %s42, 1
        %s435 = scalar_lea.sflag [#allocation4], %s434
        %s436 = sand.u32 %s42, 1
        %s437 = smul.addr %s436, 16
        %s438 = scalar_lea.vmem [#allocation3], %s437
        // Predicated region
        $region61: #{tpu_custom_call.1} parent=59 // pred_check
          %p439 = pneg %p55
        $region62: #{tpu_custom_call.1} parent=59 // pred_check_branch
          %441 = sbr.rel (%p439) target = $region64
        $region63: #{tpu_custom_call.1} parent=59 // pred_region
          %442 = dma.done %s435, 256
        $region64: #{tpu_custom_call.1} parent=59 // pred_fallthru
          _
        %s443 = sand.u32 %s34, 1
        %s444 = scalar_lea.sflag [#allocation7], %s443
        %s445 = sand.u32 %s68, 1
        %s446 = smul.addr %s445, 1024
        %s447 = scalar_lea.vmem [#allocation6], %s446
        // Predicated region
        $region65: #{tpu_custom_call.1} parent=59 // pred_check
          %p448 = pneg %p81
        $region66: #{tpu_custom_call.1} parent=59 // pred_check_branch
          %450 = sbr.rel (%p448) target = $region68
        $region67: #{tpu_custom_call.1} parent=59 // pred_region
          %451 = dma.done %s444, 16384
        $region68: #{tpu_custom_call.1} parent=59 // pred_fallthru
          _
        // Predicated region
        $region69: #{tpu_custom_call.1} parent=59 // pred_check
          %p452 = pneg %p102
        $region70: #{tpu_custom_call.1} parent=59 // pred_check_branch
          %454 = sbr.rel (%p452) target = $region72
        $region71: #{tpu_custom_call.1} parent=59 // pred_region
          %455 = dma.done [#allocation7], 64
        $region72: #{tpu_custom_call.1} parent=59 // pred_fallthru
          _
        // Predicated region
        $region73: #{tpu_custom_call.1} parent=59 // pred_check
          %p456 = pneg %p123
        $region74: #{tpu_custom_call.1} parent=59 // pred_check_branch
          %458 = sbr.rel (%p456) target = $region76
        $region75: #{tpu_custom_call.1} parent=59 // pred_region
          %459 = dma.done [#allocation10], 16384
        $region76: #{tpu_custom_call.1} parent=59 // pred_fallthru
          _
        // Predicated region
        $region77: #{tpu_custom_call.1} parent=59 // pred_check
          %p460 = pneg %p144
        $region78: #{tpu_custom_call.1} parent=59 // pred_check_branch
          %462 = sbr.rel (%p460) target = $region80
        $region79: #{tpu_custom_call.1} parent=59 // pred_region
          %463 = dma.done [#allocation10], 64
        $region80: #{tpu_custom_call.1} parent=59 // pred_fallthru
          _
        // Predicated region
        $region81: #{tpu_custom_call.1} parent=59 // pred_check
          %p464 = pneg %p165
        $region82: #{tpu_custom_call.1} parent=59 // pred_check_branch
          %466 = sbr.rel (%p464) target = $region84
        $region83: #{tpu_custom_call.1} parent=59 // pred_region
          %467 = dma.done [#allocation13], 64
        $region84: #{tpu_custom_call.1} parent=59 // pred_fallthru
          _
        // Predicated region
        $region85: #{tpu_custom_call.1} parent=59 // pred_check
          %p468 = pneg %p186
        $region86: #{tpu_custom_call.1} parent=59 // pred_check_branch
          %470 = sbr.rel (%p468) target = $region88
        $region87: #{tpu_custom_call.1} parent=59 // pred_region
          %471 = dma.done [#allocation13], 64
        $region88: #{tpu_custom_call.1} parent=59 // pred_fallthru
          _
        // Predicated region
        $region89: #{tpu_custom_call.1} parent=59 // pred_check
          %p472 = pneg %p207
        $region90: #{tpu_custom_call.1} parent=59 // pred_check_branch
          %474 = sbr.rel (%p472) target = $region92
        $region91: #{tpu_custom_call.1} parent=59 // pred_region
          %475 = dma.done [#allocation16], 4096
        $region92: #{tpu_custom_call.1} parent=59 // pred_fallthru
          _
        %s476 = sand.u32 %s42, 1
        %s477 = scalar_lea.sflag [#allocation4], %s476
        %s478 = sand.u32 %s42, 1
        %s479 = smul.addr %s478, 16
        %s480 = scalar_lea.vmem [#allocation3], %s479
        %p481 = pneg %p55
        %p482 = pneg %p52
        %s483 = sand.u32 %s34, 1
        %s484 = scalar_lea.sflag [#allocation7], %s483
        %s485 = sand.u32 %s68, 1
        %s486 = smul.addr %s485, 1024
        %s487 = scalar_lea.vmem [#allocation6], %s486
        %p488 = pneg %p81
        %p489 = pneg %p78
        %p490 = pneg %p102
        %p491 = pneg %p99
        %p492 = pneg %p123
        %p493 = pneg %p120
        %p494 = pneg %p144
        %p495 = pneg %p141
        %p496 = pneg %p165
        %p497 = pneg %p162
        %p498 = pneg %p186
        %p499 = pneg %p183
        %p500 = pneg %p207
        %p501 = pneg %p204
        %p502 = pneg %p228
        %p503 = pneg %p225
        %p504 = pneg %p249
        %p505 = pneg %p246
        %p506 = pneg %p270
        %p507 = pneg %p267
        %p508 = pneg %p291
        %p509 = pneg %p288
        %s510 = smul.u32 4, %s34
        %s511 = smul.u32 64, %s34
        %p513 = scmp.eq.s32.totalorder %s34, 0
        // Predicated region
        $region93: #{tpu_custom_call.1} parent=59 // pred_check
          %p514 = pneg %p513
        $region94: #{tpu_custom_call.1} parent=59 // pred_check_branch
          %516 = sbr.rel (%p514) target = $region96
        $region95: #{tpu_custom_call.1} parent=59 // pred_region
          %517 = vst [vmem:[#allocation2] sm:$0xff] 0.0
          %518 = vst [vmem:[#allocation2 + $0x8] sm:$0xff] 0.0
          %519 = vst [vmem:[#allocation2 + $0x10] sm:$0xff] 0.0
          %520 = vst [vmem:[#allocation2 + $0x18] sm:$0xff] 0.0
        $region96: #{tpu_custom_call.1} parent=59 // pred_fallthru
          _
        %v521 = vld [vmem:[#allocation2] sm:$0xff]
        %v522 = vld [vmem:[#allocation2 + $0x8] sm:$0xff]
        %v523 = vld [vmem:[#allocation2 + $0x10] sm:$0xff]
        %v524 = vld [vmem:[#allocation2 + $0x18] sm:$0xff]
        %v525 = vld [vmem:[%s438] sm:$0xff]
        %v526 = vld [vmem:[%s438 + $0x8] sm:$0xff]
        %v527 = vld [vmem:[%s447] sm:$0xff]
        %v528 = vld [vmem:[%s447 + $0x8] sm:$0xff]
        %v529 = vld [vmem:[%s447 + $0x10] sm:$0xff]
        %v530 = vld [vmem:[%s447 + $0x18] sm:$0xff]
        %v531 = vld [vmem:[%s447 + $0x20] sm:$0xff]
        %v532 = vld [vmem:[%s447 + $0x28] sm:$0xff]
        %v533 = vld [vmem:[%s447 + $0x30] sm:$0xff]
        %v534 = vld [vmem:[%s447 + $0x38] sm:$0xff]
        %v535 = vld [vmem:[%s447 + $0x40] sm:$0xff]
        %v536 = vld [vmem:[%s447 + $0x48] sm:$0xff]
        %v537 = vld [vmem:[%s447 + $0x50] sm:$0xff]
        %v538 = vld [vmem:[%s447 + $0x58] sm:$0xff]
        %v539 = vld [vmem:[%s447 + $0x60] sm:$0xff]
        %v540 = vld [vmem:[%s447 + $0x68] sm:$0xff]
        %v541 = vld [vmem:[%s447 + $0x70] sm:$0xff]
        %v542 = vld [vmem:[%s447 + $0x78] sm:$0xff]
        %v543 = vld [vmem:[%s447 + $0x80] sm:$0xff]
        %v544 = vld [vmem:[%s447 + $0x88] sm:$0xff]
        %v545 = vld [vmem:[%s447 + $0x90] sm:$0xff]
        %v546 = vld [vmem:[%s447 + $0x98] sm:$0xff]
        %v547 = vld [vmem:[%s447 + $0xa0] sm:$0xff]
        %v548 = vld [vmem:[%s447 + $0xa8] sm:$0xff]
        %v549 = vld [vmem:[%s447 + $0xb0] sm:$0xff]
        %v550 = vld [vmem:[%s447 + $0xb8] sm:$0xff]
        %v551 = vld [vmem:[%s447 + $0xc0] sm:$0xff]
        %v552 = vld [vmem:[%s447 + $0xc8] sm:$0xff]
        %v553 = vld [vmem:[%s447 + $0xd0] sm:$0xff]
        %v554 = vld [vmem:[%s447 + $0xd8] sm:$0xff]
        %v555 = vld [vmem:[%s447 + $0xe0] sm:$0xff]
        %v556 = vld [vmem:[%s447 + $0xe8] sm:$0xff]
        %v557 = vld [vmem:[%s447 + $0xf0] sm:$0xff]
        %v558 = vld [vmem:[%s447 + $0xf8] sm:$0xff]
        %v559 = vld [vmem:[%s447 + $0x100] sm:$0xff]
        %v560 = vld [vmem:[%s447 + $0x108] sm:$0xff]
        %v561 = vld [vmem:[%s447 + $0x110] sm:$0xff]
        %v562 = vld [vmem:[%s447 + $0x118] sm:$0xff]
        %v563 = vld [vmem:[%s447 + $0x120] sm:$0xff]
        %v564 = vld [vmem:[%s447 + $0x128] sm:$0xff]
        %v565 = vld [vmem:[%s447 + $0x130] sm:$0xff]
        %v566 = vld [vmem:[%s447 + $0x138] sm:$0xff]
        %v567 = vld [vmem:[%s447 + $0x140] sm:$0xff]
        %v568 = vld [vmem:[%s447 + $0x148] sm:$0xff]
        %v569 = vld [vmem:[%s447 + $0x150] sm:$0xff]
        %v570 = vld [vmem:[%s447 + $0x158] sm:$0xff]
        %v571 = vld [vmem:[%s447 + $0x160] sm:$0xff]
        %v572 = vld [vmem:[%s447 + $0x168] sm:$0xff]
        %v573 = vld [vmem:[%s447 + $0x170] sm:$0xff]
        %v574 = vld [vmem:[%s447 + $0x178] sm:$0xff]
        %v575 = vld [vmem:[%s447 + $0x180] sm:$0xff]
        %v576 = vld [vmem:[%s447 + $0x188] sm:$0xff]
        %v577 = vld [vmem:[%s447 + $0x190] sm:$0xff]
        %v578 = vld [vmem:[%s447 + $0x198] sm:$0xff]
        %v579 = vld [vmem:[%s447 + $0x1a0] sm:$0xff]
        %v580 = vld [vmem:[%s447 + $0x1a8] sm:$0xff]
        %v581 = vld [vmem:[%s447 + $0x1b0] sm:$0xff]
        %v582 = vld [vmem:[%s447 + $0x1b8] sm:$0xff]
        %v583 = vld [vmem:[%s447 + $0x1c0] sm:$0xff]
        %v584 = vld [vmem:[%s447 + $0x1c8] sm:$0xff]
        %v585 = vld [vmem:[%s447 + $0x1d0] sm:$0xff]
        %v586 = vld [vmem:[%s447 + $0x1d8] sm:$0xff]
        %v587 = vld [vmem:[%s447 + $0x1e0] sm:$0xff]
        %v588 = vld [vmem:[%s447 + $0x1e8] sm:$0xff]
        %v589 = vld [vmem:[%s447 + $0x1f0] sm:$0xff]
        %v590 = vld [vmem:[%s447 + $0x1f8] sm:$0xff]
        %v591 = vld [vmem:[%s447 + $0x200] sm:$0xff]
        %v592 = vld [vmem:[%s447 + $0x208] sm:$0xff]
        %v593 = vld [vmem:[%s447 + $0x210] sm:$0xff]
        %v594 = vld [vmem:[%s447 + $0x218] sm:$0xff]
        %v595 = vld [vmem:[%s447 + $0x220] sm:$0xff]
        %v596 = vld [vmem:[%s447 + $0x228] sm:$0xff]
        %v597 = vld [vmem:[%s447 + $0x230] sm:$0xff]
        %v598 = vld [vmem:[%s447 + $0x238] sm:$0xff]
        %v599 = vld [vmem:[%s447 + $0x240] sm:$0xff]
        %v600 = vld [vmem:[%s447 + $0x248] sm:$0xff]
        %v601 = vld [vmem:[%s447 + $0x250] sm:$0xff]
        %v602 = vld [vmem:[%s447 + $0x258] sm:$0xff]
        %v603 = vld [vmem:[%s447 + $0x260] sm:$0xff]
        %v604 = vld [vmem:[%s447 + $0x268] sm:$0xff]
        %v605 = vld [vmem:[%s447 + $0x270] sm:$0xff]
        %v606 = vld [vmem:[%s447 + $0x278] sm:$0xff]
        %v607 = vld [vmem:[%s447 + $0x280] sm:$0xff]
        %v608 = vld [vmem:[%s447 + $0x288] sm:$0xff]
        %v609 = vld [vmem:[%s447 + $0x290] sm:$0xff]
        %v610 = vld [vmem:[%s447 + $0x298] sm:$0xff]
        %v611 = vld [vmem:[%s447 + $0x2a0] sm:$0xff]
        %v612 = vld [vmem:[%s447 + $0x2a8] sm:$0xff]
        %v613 = vld [vmem:[%s447 + $0x2b0] sm:$0xff]
        %v614 = vld [vmem:[%s447 + $0x2b8] sm:$0xff]
        %v615 = vld [vmem:[%s447 + $0x2c0] sm:$0xff]
        %v616 = vld [vmem:[%s447 + $0x2c8] sm:$0xff]
        %v617 = vld [vmem:[%s447 + $0x2d0] sm:$0xff]
        %v618 = vld [vmem:[%s447 + $0x2d8] sm:$0xff]
        %v619 = vld [vmem:[%s447 + $0x2e0] sm:$0xff]
        %v620 = vld [vmem:[%s447 + $0x2e8] sm:$0xff]
        %v621 = vld [vmem:[%s447 + $0x2f0] sm:$0xff]
        %v622 = vld [vmem:[%s447 + $0x2f8] sm:$0xff]
        %v623 = vld [vmem:[%s447 + $0x300] sm:$0xff]
        %v624 = vld [vmem:[%s447 + $0x308] sm:$0xff]
        %v625 = vld [vmem:[%s447 + $0x310] sm:$0xff]
        %v626 = vld [vmem:[%s447 + $0x318] sm:$0xff]
        %v627 = vld [vmem:[%s447 + $0x320] sm:$0xff]
        %v628 = vld [vmem:[%s447 + $0x328] sm:$0xff]
        %v629 = vld [vmem:[%s447 + $0x330] sm:$0xff]
        %v630 = vld [vmem:[%s447 + $0x338] sm:$0xff]
        %v631 = vld [vmem:[%s447 + $0x340] sm:$0xff]
        %v632 = vld [vmem:[%s447 + $0x348] sm:$0xff]
        %v633 = vld [vmem:[%s447 + $0x350] sm:$0xff]
        %v634 = vld [vmem:[%s447 + $0x358] sm:$0xff]
        %v635 = vld [vmem:[%s447 + $0x360] sm:$0xff]
        %v636 = vld [vmem:[%s447 + $0x368] sm:$0xff]
        %v637 = vld [vmem:[%s447 + $0x370] sm:$0xff]
        %v638 = vld [vmem:[%s447 + $0x378] sm:$0xff]
        %v639 = vld [vmem:[%s447 + $0x380] sm:$0xff]
        %v640 = vld [vmem:[%s447 + $0x388] sm:$0xff]
        %v641 = vld [vmem:[%s447 + $0x390] sm:$0xff]
        %v642 = vld [vmem:[%s447 + $0x398] sm:$0xff]
        %v643 = vld [vmem:[%s447 + $0x3a0] sm:$0xff]
        %v644 = vld [vmem:[%s447 + $0x3a8] sm:$0xff]
        %v645 = vld [vmem:[%s447 + $0x3b0] sm:$0xff]
        %v646 = vld [vmem:[%s447 + $0x3b8] sm:$0xff]
        %v647 = vld [vmem:[%s447 + $0x3c0] sm:$0xff]
        %v648 = vld [vmem:[%s447 + $0x3c8] sm:$0xff]
        %v649 = vld [vmem:[%s447 + $0x3d0] sm:$0xff]
        %v650 = vld [vmem:[%s447 + $0x3d8] sm:$0xff]
        %v651 = vld [vmem:[%s447 + $0x3e0] sm:$0xff]
        %v652 = vld [vmem:[%s447 + $0x3e8] sm:$0xff]
        %v653 = vld [vmem:[%s447 + $0x3f0] sm:$0xff]
        %v654 = vld [vmem:[%s447 + $0x3f8] sm:$0xff]
        %v657 = vunpack.c.l.b16 %v525
        %v658 = vunpack.c.h.b16 %v525
        %v659 = vunpack.c.l.b16 %v526
        %v660 = vunpack.c.h.b16 %v526
        %v661 = vpack.c.b16 %v657, %v657
        %v662 = vpack.c.b16 %v658, %v658
        %v663 = vpack.c.b16 %v659, %v659
        %v664 = vpack.c.b16 %v660, %v660
        %v797 = vunpack.c.l.b16 %v527
        %v798 = vunpack.c.h.b16 %v527
        %v799 = vunpack.c.l.b16 %v528
        %v800 = vunpack.c.h.b16 %v528
        %v801 = vunpack.c.l.b16 %v529
        %v802 = vunpack.c.h.b16 %v529
        %v803 = vunpack.c.l.b16 %v530
        %v804 = vunpack.c.h.b16 %v530
        %v805 = vunpack.c.l.b16 %v531
        %v806 = vunpack.c.h.b16 %v531
        %v807 = vunpack.c.l.b16 %v532
        %v808 = vunpack.c.h.b16 %v532
        %v809 = vunpack.c.l.b16 %v533
        %v810 = vunpack.c.h.b16 %v533
        %v811 = vunpack.c.l.b16 %v534
        %v812 = vunpack.c.h.b16 %v534
        %v813 = vunpack.c.l.b16 %v535
        %v814 = vunpack.c.h.b16 %v535
        %v815 = vunpack.c.l.b16 %v536
        %v816 = vunpack.c.h.b16 %v536
        %v817 = vunpack.c.l.b16 %v537
        %v818 = vunpack.c.h.b16 %v537
        %v819 = vunpack.c.l.b16 %v538
        %v820 = vunpack.c.h.b16 %v538
        %v821 = vunpack.c.l.b16 %v539
        %v822 = vunpack.c.h.b16 %v539
        %v823 = vunpack.c.l.b16 %v540
        %v824 = vunpack.c.h.b16 %v540
        %v825 = vunpack.c.l.b16 %v541
        %v826 = vunpack.c.h.b16 %v541
        %v827 = vunpack.c.l.b16 %v542
        %v828 = vunpack.c.h.b16 %v542
        %v829 = vunpack.c.l.b16 %v543
        %v830 = vunpack.c.h.b16 %v543
        %v831 = vunpack.c.l.b16 %v544
        %v832 = vunpack.c.h.b16 %v544
        %v833 = vunpack.c.l.b16 %v545
        %v834 = vunpack.c.h.b16 %v545
        %v835 = vunpack.c.l.b16 %v546
        %v836 = vunpack.c.h.b16 %v546
        %v837 = vunpack.c.l.b16 %v547
        %v838 = vunpack.c.h.b16 %v547
        %v839 = vunpack.c.l.b16 %v548
        %v840 = vunpack.c.h.b16 %v548
        %v841 = vunpack.c.l.b16 %v549
        %v842 = vunpack.c.h.b16 %v549
        %v843 = vunpack.c.l.b16 %v550
        %v844 = vunpack.c.h.b16 %v550
        %v845 = vunpack.c.l.b16 %v551
        %v846 = vunpack.c.h.b16 %v551
        %v847 = vunpack.c.l.b16 %v552
        %v848 = vunpack.c.h.b16 %v552
        %v849 = vunpack.c.l.b16 %v553
        %v850 = vunpack.c.h.b16 %v553
        %v851 = vunpack.c.l.b16 %v554
        %v852 = vunpack.c.h.b16 %v554
        %v853 = vunpack.c.l.b16 %v555
        %v854 = vunpack.c.h.b16 %v555
        %v855 = vunpack.c.l.b16 %v556
        %v856 = vunpack.c.h.b16 %v556
        %v857 = vunpack.c.l.b16 %v557
        %v858 = vunpack.c.h.b16 %v557
        %v859 = vunpack.c.l.b16 %v558
        %v860 = vunpack.c.h.b16 %v558
        %v861 = vunpack.c.l.b16 %v559
        %v862 = vunpack.c.h.b16 %v559
        %v863 = vunpack.c.l.b16 %v560
        %v864 = vunpack.c.h.b16 %v560
        %v865 = vunpack.c.l.b16 %v561
        %v866 = vunpack.c.h.b16 %v561
        %v867 = vunpack.c.l.b16 %v562
        %v868 = vunpack.c.h.b16 %v562
        %v869 = vunpack.c.l.b16 %v563
        %v870 = vunpack.c.h.b16 %v563
        %v871 = vunpack.c.l.b16 %v564
        %v872 = vunpack.c.h.b16 %v564
        %v873 = vunpack.c.l.b16 %v565
        %v874 = vunpack.c.h.b16 %v565
        %v875 = vunpack.c.l.b16 %v566
        %v876 = vunpack.c.h.b16 %v566
        %v877 = vunpack.c.l.b16 %v567
        %v878 = vunpack.c.h.b16 %v567
        %v879 = vunpack.c.l.b16 %v568
        %v880 = vunpack.c.h.b16 %v568
        %v881 = vunpack.c.l.b16 %v569
        %v882 = vunpack.c.h.b16 %v569
        %v883 = vunpack.c.l.b16 %v570
        %v884 = vunpack.c.h.b16 %v570
        %v885 = vunpack.c.l.b16 %v571
        %v886 = vunpack.c.h.b16 %v571
        %v887 = vunpack.c.l.b16 %v572
        %v888 = vunpack.c.h.b16 %v572
        %v889 = vunpack.c.l.b16 %v573
        %v890 = vunpack.c.h.b16 %v573
        %v891 = vunpack.c.l.b16 %v574
        %v892 = vunpack.c.h.b16 %v574
        %v893 = vunpack.c.l.b16 %v575
        %v894 = vunpack.c.h.b16 %v575
        %v895 = vunpack.c.l.b16 %v576
        %v896 = vunpack.c.h.b16 %v576
        %v897 = vunpack.c.l.b16 %v577
        %v898 = vunpack.c.h.b16 %v577
        %v899 = vunpack.c.l.b16 %v578
        %v900 = vunpack.c.h.b16 %v578
        %v901 = vunpack.c.l.b16 %v579
        %v902 = vunpack.c.h.b16 %v579
        %v903 = vunpack.c.l.b16 %v580
        %v904 = vunpack.c.h.b16 %v580
        %v905 = vunpack.c.l.b16 %v581
        %v906 = vunpack.c.h.b16 %v581
        %v907 = vunpack.c.l.b16 %v582
        %v908 = vunpack.c.h.b16 %v582
        %v909 = vunpack.c.l.b16 %v583
        %v910 = vunpack.c.h.b16 %v583
        %v911 = vunpack.c.l.b16 %v584
        %v912 = vunpack.c.h.b16 %v584
        %v913 = vunpack.c.l.b16 %v585
        %v914 = vunpack.c.h.b16 %v585
        %v915 = vunpack.c.l.b16 %v586
        %v916 = vunpack.c.h.b16 %v586
        %v917 = vunpack.c.l.b16 %v587
        %v918 = vunpack.c.h.b16 %v587
        %v919 = vunpack.c.l.b16 %v588
        %v920 = vunpack.c.h.b16 %v588
        %v921 = vunpack.c.l.b16 %v589
        %v922 = vunpack.c.h.b16 %v589
        %v923 = vunpack.c.l.b16 %v590
        %v924 = vunpack.c.h.b16 %v590
        %v925 = vunpack.c.l.b16 %v591
        %v926 = vunpack.c.h.b16 %v591
        %v927 = vunpack.c.l.b16 %v592
        %v928 = vunpack.c.h.b16 %v592
        %v929 = vunpack.c.l.b16 %v593
        %v930 = vunpack.c.h.b16 %v593
        %v931 = vunpack.c.l.b16 %v594
        %v932 = vunpack.c.h.b16 %v594
        %v933 = vunpack.c.l.b16 %v595
        %v934 = vunpack.c.h.b16 %v595
        %v935 = vunpack.c.l.b16 %v596
        %v936 = vunpack.c.h.b16 %v596
        %v937 = vunpack.c.l.b16 %v597
        %v938 = vunpack.c.h.b16 %v597
        %v939 = vunpack.c.l.b16 %v598
        %v940 = vunpack.c.h.b16 %v598
        %v941 = vunpack.c.l.b16 %v599
        %v942 = vunpack.c.h.b16 %v599
        %v943 = vunpack.c.l.b16 %v600
        %v944 = vunpack.c.h.b16 %v600
        %v945 = vunpack.c.l.b16 %v601
        %v946 = vunpack.c.h.b16 %v601
        %v947 = vunpack.c.l.b16 %v602
        %v948 = vunpack.c.h.b16 %v602
        %v949 = vunpack.c.l.b16 %v603
        %v950 = vunpack.c.h.b16 %v603
        %v951 = vunpack.c.l.b16 %v604
        %v952 = vunpack.c.h.b16 %v604
        %v953 = vunpack.c.l.b16 %v605
        %v954 = vunpack.c.h.b16 %v605
        %v955 = vunpack.c.l.b16 %v606
        %v956 = vunpack.c.h.b16 %v606
        %v957 = vunpack.c.l.b16 %v607
        %v958 = vunpack.c.h.b16 %v607
        %v959 = vunpack.c.l.b16 %v608
        %v960 = vunpack.c.h.b16 %v608
        %v961 = vunpack.c.l.b16 %v609
        %v962 = vunpack.c.h.b16 %v609
        %v963 = vunpack.c.l.b16 %v610
        %v964 = vunpack.c.h.b16 %v610
        %v965 = vunpack.c.l.b16 %v611
        %v966 = vunpack.c.h.b16 %v611
        %v967 = vunpack.c.l.b16 %v612
        %v968 = vunpack.c.h.b16 %v612
        %v969 = vunpack.c.l.b16 %v613
        %v970 = vunpack.c.h.b16 %v613
        %v971 = vunpack.c.l.b16 %v614
        %v972 = vunpack.c.h.b16 %v614
        %v973 = vunpack.c.l.b16 %v615
        %v974 = vunpack.c.h.b16 %v615
        %v975 = vunpack.c.l.b16 %v616
        %v976 = vunpack.c.h.b16 %v616
        %v977 = vunpack.c.l.b16 %v617
        %v978 = vunpack.c.h.b16 %v617
        %v979 = vunpack.c.l.b16 %v618
        %v980 = vunpack.c.h.b16 %v618
        %v981 = vunpack.c.l.b16 %v619
        %v982 = vunpack.c.h.b16 %v619
        %v983 = vunpack.c.l.b16 %v620
        %v984 = vunpack.c.h.b16 %v620
        %v985 = vunpack.c.l.b16 %v621
        %v986 = vunpack.c.h.b16 %v621
        %v987 = vunpack.c.l.b16 %v622
        %v988 = vunpack.c.h.b16 %v622
        %v989 = vunpack.c.l.b16 %v623
        %v990 = vunpack.c.h.b16 %v623
        %v991 = vunpack.c.l.b16 %v624
        %v992 = vunpack.c.h.b16 %v624
        %v993 = vunpack.c.l.b16 %v625
        %v994 = vunpack.c.h.b16 %v625
        %v995 = vunpack.c.l.b16 %v626
        %v996 = vunpack.c.h.b16 %v626
        %v997 = vunpack.c.l.b16 %v627
        %v998 = vunpack.c.h.b16 %v627
        %v999 = vunpack.c.l.b16 %v628
        %v1000 = vunpack.c.h.b16 %v628
        %v1001 = vunpack.c.l.b16 %v629
        %v1002 = vunpack.c.h.b16 %v629
        %v1003 = vunpack.c.l.b16 %v630
        %v1004 = vunpack.c.h.b16 %v630
        %v1005 = vunpack.c.l.b16 %v631
        %v1006 = vunpack.c.h.b16 %v631
        %v1007 = vunpack.c.l.b16 %v632
        %v1008 = vunpack.c.h.b16 %v632
        %v1009 = vunpack.c.l.b16 %v633
        %v1010 = vunpack.c.h.b16 %v633
        %v1011 = vunpack.c.l.b16 %v634
        %v1012 = vunpack.c.h.b16 %v634
        %v1013 = vunpack.c.l.b16 %v635
        %v1014 = vunpack.c.h.b16 %v635
        %v1015 = vunpack.c.l.b16 %v636
        %v1016 = vunpack.c.h.b16 %v636
        %v1017 = vunpack.c.l.b16 %v637
        %v1018 = vunpack.c.h.b16 %v637
        %v1019 = vunpack.c.l.b16 %v638
        %v1020 = vunpack.c.h.b16 %v638
        %v1021 = vunpack.c.l.b16 %v639
        %v1022 = vunpack.c.h.b16 %v639
        %v1023 = vunpack.c.l.b16 %v640
        %v1024 = vunpack.c.h.b16 %v640
        %v1025 = vunpack.c.l.b16 %v641
        %v1026 = vunpack.c.h.b16 %v641
        %v1027 = vunpack.c.l.b16 %v642
        %v1028 = vunpack.c.h.b16 %v642
        %v1029 = vunpack.c.l.b16 %v643
        %v1030 = vunpack.c.h.b16 %v643
        %v1031 = vunpack.c.l.b16 %v644
        %v1032 = vunpack.c.h.b16 %v644
        %v1033 = vunpack.c.l.b16 %v645
        %v1034 = vunpack.c.h.b16 %v645
        %v1035 = vunpack.c.l.b16 %v646
        %v1036 = vunpack.c.h.b16 %v646
        %v1037 = vunpack.c.l.b16 %v647
        %v1038 = vunpack.c.h.b16 %v647
        %v1039 = vunpack.c.l.b16 %v648
        %v1040 = vunpack.c.h.b16 %v648
        %v1041 = vunpack.c.l.b16 %v649
        %v1042 = vunpack.c.h.b16 %v649
        %v1043 = vunpack.c.l.b16 %v650
        %v1044 = vunpack.c.h.b16 %v650
        %v1045 = vunpack.c.l.b16 %v651
        %v1046 = vunpack.c.h.b16 %v651
        %v1047 = vunpack.c.l.b16 %v652
        %v1048 = vunpack.c.h.b16 %v652
        %v1049 = vunpack.c.l.b16 %v653
        %v1050 = vunpack.c.h.b16 %v653
        %v1051 = vunpack.c.l.b16 %v654
        %v1052 = vunpack.c.h.b16 %v654
        %v1053 = vpack.c.b16 %v801, %v797
        %v1054 = vpack.c.b16 %v802, %v798
        %v1055 = vpack.c.b16 %v803, %v799
        %v1056 = vpack.c.b16 %v804, %v800
        %v1057 = vpack.c.b16 %v809, %v805
        %v1058 = vpack.c.b16 %v810, %v806
        %v1059 = vpack.c.b16 %v811, %v807
        %v1060 = vpack.c.b16 %v812, %v808
        %v1061 = vpack.c.b16 %v817, %v813
        %v1062 = vpack.c.b16 %v818, %v814
        %v1063 = vpack.c.b16 %v819, %v815
        %v1064 = vpack.c.b16 %v820, %v816
        %v1065 = vpack.c.b16 %v825, %v821
        %v1066 = vpack.c.b16 %v826, %v822
        %v1067 = vpack.c.b16 %v827, %v823
        %v1068 = vpack.c.b16 %v828, %v824
        %v1069 = vpack.c.b16 %v833, %v829
        %v1070 = vpack.c.b16 %v834, %v830
        %v1071 = vpack.c.b16 %v835, %v831
        %v1072 = vpack.c.b16 %v836, %v832
        %v1073 = vpack.c.b16 %v841, %v837
        %v1074 = vpack.c.b16 %v842, %v838
        %v1075 = vpack.c.b16 %v843, %v839
        %v1076 = vpack.c.b16 %v844, %v840
        %v1077 = vpack.c.b16 %v849, %v845
        %v1078 = vpack.c.b16 %v850, %v846
        %v1079 = vpack.c.b16 %v851, %v847
        %v1080 = vpack.c.b16 %v852, %v848
        %v1081 = vpack.c.b16 %v857, %v853
        %v1082 = vpack.c.b16 %v858, %v854
        %v1083 = vpack.c.b16 %v859, %v855
        %v1084 = vpack.c.b16 %v860, %v856
        %v1085 = vpack.c.b16 %v865, %v861
        %v1086 = vpack.c.b16 %v866, %v862
        %v1087 = vpack.c.b16 %v867, %v863
        %v1088 = vpack.c.b16 %v868, %v864
        %v1089 = vpack.c.b16 %v873, %v869
        %v1090 = vpack.c.b16 %v874, %v870
        %v1091 = vpack.c.b16 %v875, %v871
        %v1092 = vpack.c.b16 %v876, %v872
        %v1093 = vpack.c.b16 %v881, %v877
        %v1094 = vpack.c.b16 %v882, %v878
        %v1095 = vpack.c.b16 %v883, %v879
        %v1096 = vpack.c.b16 %v884, %v880
        %v1097 = vpack.c.b16 %v889, %v885
        %v1098 = vpack.c.b16 %v890, %v886
        %v1099 = vpack.c.b16 %v891, %v887
        %v1100 = vpack.c.b16 %v892, %v888
        %v1101 = vpack.c.b16 %v897, %v893
        %v1102 = vpack.c.b16 %v898, %v894
        %v1103 = vpack.c.b16 %v899, %v895
        %v1104 = vpack.c.b16 %v900, %v896
        %v1105 = vpack.c.b16 %v905, %v901
        %v1106 = vpack.c.b16 %v906, %v902
        %v1107 = vpack.c.b16 %v907, %v903
        %v1108 = vpack.c.b16 %v908, %v904
        %v1109 = vpack.c.b16 %v913, %v909
        %v1110 = vpack.c.b16 %v914, %v910
        %v1111 = vpack.c.b16 %v915, %v911
        %v1112 = vpack.c.b16 %v916, %v912
        %v1113 = vpack.c.b16 %v921, %v917
        %v1114 = vpack.c.b16 %v922, %v918
        %v1115 = vpack.c.b16 %v923, %v919
        %v1116 = vpack.c.b16 %v924, %v920
        %v1117 = vpack.c.b16 %v929, %v925
        %v1118 = vpack.c.b16 %v930, %v926
        %v1119 = vpack.c.b16 %v931, %v927
        %v1120 = vpack.c.b16 %v932, %v928
        %v1121 = vpack.c.b16 %v937, %v933
        %v1122 = vpack.c.b16 %v938, %v934
        %v1123 = vpack.c.b16 %v939, %v935
        %v1124 = vpack.c.b16 %v940, %v936
        %v1125 = vpack.c.b16 %v945, %v941
        %v1126 = vpack.c.b16 %v946, %v942
        %v1127 = vpack.c.b16 %v947, %v943
        %v1128 = vpack.c.b16 %v948, %v944
        %v1129 = vpack.c.b16 %v953, %v949
        %v1130 = vpack.c.b16 %v954, %v950
        %v1131 = vpack.c.b16 %v955, %v951
        %v1132 = vpack.c.b16 %v956, %v952
        %v1133 = vpack.c.b16 %v961, %v957
        %v1134 = vpack.c.b16 %v962, %v958
        %v1135 = vpack.c.b16 %v963, %v959
        %v1136 = vpack.c.b16 %v964, %v960
        %v1137 = vpack.c.b16 %v969, %v965
        %v1138 = vpack.c.b16 %v970, %v966
        %v1139 = vpack.c.b16 %v971, %v967
        %v1140 = vpack.c.b16 %v972, %v968
        %v1141 = vpack.c.b16 %v977, %v973
        %v1142 = vpack.c.b16 %v978, %v974
        %v1143 = vpack.c.b16 %v979, %v975
        %v1144 = vpack.c.b16 %v980, %v976
        %v1145 = vpack.c.b16 %v985, %v981
        %v1146 = vpack.c.b16 %v986, %v982
        %v1147 = vpack.c.b16 %v987, %v983
        %v1148 = vpack.c.b16 %v988, %v984
        %v1149 = vpack.c.b16 %v993, %v989
        %v1150 = vpack.c.b16 %v994, %v990
        %v1151 = vpack.c.b16 %v995, %v991
        %v1152 = vpack.c.b16 %v996, %v992
        %v1153 = vpack.c.b16 %v1001, %v997
        %v1154 = vpack.c.b16 %v1002, %v998
        %v1155 = vpack.c.b16 %v1003, %v999
        %v1156 = vpack.c.b16 %v1004, %v1000
        %v1157 = vpack.c.b16 %v1009, %v1005
        %v1158 = vpack.c.b16 %v1010, %v1006
        %v1159 = vpack.c.b16 %v1011, %v1007
        %v1160 = vpack.c.b16 %v1012, %v1008
        %v1161 = vpack.c.b16 %v1017, %v1013
        %v1162 = vpack.c.b16 %v1018, %v1014
        %v1163 = vpack.c.b16 %v1019, %v1015
        %v1164 = vpack.c.b16 %v1020, %v1016
        %v1165 = vpack.c.b16 %v1025, %v1021
        %v1166 = vpack.c.b16 %v1026, %v1022
        %v1167 = vpack.c.b16 %v1027, %v1023
        %v1168 = vpack.c.b16 %v1028, %v1024
        %v1169 = vpack.c.b16 %v1033, %v1029
        %v1170 = vpack.c.b16 %v1034, %v1030
        %v1171 = vpack.c.b16 %v1035, %v1031
        %v1172 = vpack.c.b16 %v1036, %v1032
        %v1173 = vpack.c.b16 %v1041, %v1037
        %v1174 = vpack.c.b16 %v1042, %v1038
        %v1175 = vpack.c.b16 %v1043, %v1039
        %v1176 = vpack.c.b16 %v1044, %v1040
        %v1177 = vpack.c.b16 %v1049, %v1045
        %v1178 = vpack.c.b16 %v1050, %v1046
        %v1179 = vpack.c.b16 %v1051, %v1047
        %v1180 = vpack.c.b16 %v1052, %v1048
        %1309 = vmatprep.subr.bf16.mxu0 %v1054
        %1310 = vmatpush1.bf16.msra.mxu0 %v1053
        %1311 = vmatprep.subr.bf16.mxu0 %v1058
        %1312 = vmatpush1.bf16.msra.mxu0 %v1057
        %1313 = vmatprep.subr.bf16.mxu0 %v1062
        %1314 = vmatpush1.bf16.msra.mxu0 %v1061
        %1315 = vmatprep.subr.bf16.mxu0 %v1066
        %1316 = vmatpush1.bf16.msra.mxu0 %v1065
        %1317 = vmatprep.subr.bf16.mxu0 %v1070
        %1318 = vmatpush1.bf16.msra.mxu0 %v1069
        %1319 = vmatprep.subr.bf16.mxu0 %v1074
        %1320 = vmatpush1.bf16.msra.mxu0 %v1073
        %1321 = vmatprep.subr.bf16.mxu0 %v1078
        %1322 = vmatpush1.bf16.msra.mxu0 %v1077
        %1323 = vmatprep.subr.bf16.mxu0 %v1082
        %1324 = vmatpush1.bf16.msra.mxu0 %v1081
        %1325 = vmatprep.subr.bf16.mxu0 %v1086
        %1326 = vmatpush1.bf16.msra.mxu0 %v1085
        %1327 = vmatprep.subr.bf16.mxu0 %v1090
        %1328 = vmatpush1.bf16.msra.mxu0 %v1089
        %1329 = vmatprep.subr.bf16.mxu0 %v1094
        %1330 = vmatpush1.bf16.msra.mxu0 %v1093
        %1331 = vmatprep.subr.bf16.mxu0 %v1098
        %1332 = vmatpush1.bf16.msra.mxu0 %v1097
        %1333 = vmatprep.subr.bf16.mxu0 %v1102
        %1334 = vmatpush1.bf16.msra.mxu0 %v1101
        %1335 = vmatprep.subr.bf16.mxu0 %v1106
        %1336 = vmatpush1.bf16.msra.mxu0 %v1105
        %1337 = vmatprep.subr.bf16.mxu0 %v1110
        %1338 = vmatpush1.bf16.msra.mxu0 %v1109
        %1339 = vmatprep.subr.bf16.mxu0 %v1114
        %1340 = vmatpush1.bf16.msra.mxu0 %v1113
        %1341 = vmatprep.mubr.bf16.mxu0 %v662
        %1342 = vmatmul.mubr.bf16.gmra.mrb[0].mxu0 %v661
        %v1343 = vpop.f32.mrb[0].mxu0
        %v1344 = vadd.f32 0.0, %v1343
        %v1345 = vpop.f32.mrb[0].mxu0
        %v1346 = vadd.f32 0.0, %v1345
        %v1347 = vpop.f32.mrb[0].mxu0
        %v1348 = vpop.f32.mrb[0].mxu0
        %1349 = vdwg.mxu0
        %1350 = vmatprep.subr.bf16.mxu0 %v1118
        %1351 = vmatpush1.bf16.msra.mxu0 %v1117
        %1352 = vmatprep.subr.bf16.mxu0 %v1122
        %1353 = vmatpush1.bf16.msra.mxu0 %v1121
        %1354 = vmatprep.subr.bf16.mxu0 %v1126
        %1355 = vmatpush1.bf16.msra.mxu0 %v1125
        %1356 = vmatprep.subr.bf16.mxu0 %v1130
        %1357 = vmatpush1.bf16.msra.mxu0 %v1129
        %1358 = vmatprep.subr.bf16.mxu0 %v1134
        %1359 = vmatpush1.bf16.msra.mxu0 %v1133
        %1360 = vmatprep.subr.bf16.mxu0 %v1138
        %1361 = vmatpush1.bf16.msra.mxu0 %v1137
        %1362 = vmatprep.subr.bf16.mxu0 %v1142
        %1363 = vmatpush1.bf16.msra.mxu0 %v1141
        %1364 = vmatprep.subr.bf16.mxu0 %v1146
        %1365 = vmatpush1.bf16.msra.mxu0 %v1145
        %1366 = vmatprep.subr.bf16.mxu0 %v1150
        %1367 = vmatpush1.bf16.msra.mxu0 %v1149
        %1368 = vmatprep.subr.bf16.mxu0 %v1154
        %1369 = vmatpush1.bf16.msra.mxu0 %v1153
        %1370 = vmatprep.subr.bf16.mxu0 %v1158
        %1371 = vmatpush1.bf16.msra.mxu0 %v1157
        %1372 = vmatprep.subr.bf16.mxu0 %v1162
        %1373 = vmatpush1.bf16.msra.mxu0 %v1161
        %1374 = vmatprep.subr.bf16.mxu0 %v1166
        %1375 = vmatpush1.bf16.msra.mxu0 %v1165
        %1376 = vmatprep.subr.bf16.mxu0 %v1170
        %1377 = vmatpush1.bf16.msra.mxu0 %v1169
        %1378 = vmatprep.subr.bf16.mxu0 %v1174
        %1379 = vmatpush1.bf16.msra.mxu0 %v1173
        %1380 = vmatprep.subr.bf16.mxu0 %v1178
        %1381 = vmatpush1.bf16.msra.mxu0 %v1177
        %1382 = vmatprep.mubr.bf16.mxu0 %v664
        %1383 = vmatmul.mubr.bf16.gmra.mrb[0].mxu0 %v663
        %v1384 = vpop.f32.mrb[0].mxu0
        %v1385 = vadd.f32 %v1344, %v1384
        %v1386 = vpop.f32.mrb[0].mxu0
        %v1387 = vadd.f32 %v1346, %v1386
        %v1388 = vpop.f32.mrb[0].mxu0
        %v1389 = vpop.f32.mrb[0].mxu0
        %1390 = vdwg.mxu0
        %1391 = vmatprep.subr.bf16.mxu0 %v1056
        %1392 = vmatpush1.bf16.msra.mxu0 %v1055
        %1393 = vmatprep.subr.bf16.mxu0 %v1060
        %1394 = vmatpush1.bf16.msra.mxu0 %v1059
        %1395 = vmatprep.subr.bf16.mxu0 %v1064
        %1396 = vmatpush1.bf16.msra.mxu0 %v1063
        %1397 = vmatprep.subr.bf16.mxu0 %v1068
        %1398 = vmatpush1.bf16.msra.mxu0 %v1067
        %1399 = vmatprep.subr.bf16.mxu0 %v1072
        %1400 = vmatpush1.bf16.msra.mxu0 %v1071
        %1401 = vmatprep.subr.bf16.mxu0 %v1076
        %1402 = vmatpush1.bf16.msra.mxu0 %v1075
        %1403 = vmatprep.subr.bf16.mxu0 %v1080
        %1404 = vmatpush1.bf16.msra.mxu0 %v1079
        %1405 = vmatprep.subr.bf16.mxu0 %v1084
        %1406 = vmatpush1.bf16.msra.mxu0 %v1083
        %1407 = vmatprep.subr.bf16.mxu0 %v1088
        %1408 = vmatpush1.bf16.msra.mxu0 %v1087
        %1409 = vmatprep.subr.bf16.mxu0 %v1092
        %1410 = vmatpush1.bf16.msra.mxu0 %v1091
        %1411 = vmatprep.subr.bf16.mxu0 %v1096
        %1412 = vmatpush1.bf16.msra.mxu0 %v1095
        %1413 = vmatprep.subr.bf16.mxu0 %v1100
        %1414 = vmatpush1.bf16.msra.mxu0 %v1099
        %1415 = vmatprep.subr.bf16.mxu0 %v1104
        %1416 = vmatpush1.bf16.msra.mxu0 %v1103
        %1417 = vmatprep.subr.bf16.mxu0 %v1108
        %1418 = vmatpush1.bf16.msra.mxu0 %v1107
        %1419 = vmatprep.subr.bf16.mxu0 %v1112
        %1420 = vmatpush1.bf16.msra.mxu0 %v1111
        %1421 = vmatprep.subr.bf16.mxu0 %v1116
        %1422 = vmatpush1.bf16.msra.mxu0 %v1115
        %1423 = vmatprep.mubr.bf16.mxu0 %v662
        %1424 = vmatmul.mubr.bf16.gmra.mrb[0].mxu0 %v661
        %v1425 = vpop.f32.mrb[0].mxu0
        %v1426 = vadd.f32 0.0, %v1425
        %v1427 = vpop.f32.mrb[0].mxu0
        %v1428 = vadd.f32 0.0, %v1427
        %v1429 = vpop.f32.mrb[0].mxu0
        %v1430 = vpop.f32.mrb[0].mxu0
        %1431 = vdwg.mxu0
        %1432 = vmatprep.subr.bf16.mxu0 %v1120
        %1433 = vmatpush1.bf16.msra.mxu0 %v1119
        %1434 = vmatprep.subr.bf16.mxu0 %v1124
        %1435 = vmatpush1.bf16.msra.mxu0 %v1123
        %1436 = vmatprep.subr.bf16.mxu0 %v1128
        %1437 = vmatpush1.bf16.msra.mxu0 %v1127
        %1438 = vmatprep.subr.bf16.mxu0 %v1132
        %1439 = vmatpush1.bf16.msra.mxu0 %v1131
        %1440 = vmatprep.subr.bf16.mxu0 %v1136
        %1441 = vmatpush1.bf16.msra.mxu0 %v1135
        %1442 = vmatprep.subr.bf16.mxu0 %v1140
        %1443 = vmatpush1.bf16.msra.mxu0 %v1139
        %1444 = vmatprep.subr.bf16.mxu0 %v1144
        %1445 = vmatpush1.bf16.msra.mxu0 %v1143
        %1446 = vmatprep.subr.bf16.mxu0 %v1148
        %1447 = vmatpush1.bf16.msra.mxu0 %v1147
        %1448 = vmatprep.subr.bf16.mxu0 %v1152
        %1449 = vmatpush1.bf16.msra.mxu0 %v1151
        %1450 = vmatprep.subr.bf16.mxu0 %v1156
        %1451 = vmatpush1.bf16.msra.mxu0 %v1155
        %1452 = vmatprep.subr.bf16.mxu0 %v1160
        %1453 = vmatpush1.bf16.msra.mxu0 %v1159
        %1454 = vmatprep.subr.bf16.mxu0 %v1164
        %1455 = vmatpush1.bf16.msra.mxu0 %v1163
        %1456 = vmatprep.subr.bf16.mxu0 %v1168
        %1457 = vmatpush1.bf16.msra.mxu0 %v1167
        %1458 = vmatprep.subr.bf16.mxu0 %v1172
        %1459 = vmatpush1.bf16.msra.mxu0 %v1171
        %1460 = vmatprep.subr.bf16.mxu0 %v1176
        %1461 = vmatpush1.bf16.msra.mxu0 %v1175
        %1462 = vmatprep.subr.bf16.mxu0 %v1180
        %1463 = vmatpush1.bf16.msra.mxu0 %v1179
        %1464 = vmatprep.mubr.bf16.mxu0 %v664
        %1465 = vmatmul.mubr.bf16.gmra.mrb[0].mxu0 %v663
        %v1466 = vpop.f32.mrb[0].mxu0
        %v1467 = vadd.f32 %v1426, %v1466
        %v1468 = vpop.f32.mrb[0].mxu0
        %v1469 = vadd.f32 %v1428, %v1468
        %v1470 = vpop.f32.mrb[0].mxu0
        %v1471 = vpop.f32.mrb[0].mxu0
        %1472 = vdwg.mxu0
        %v1473 = vadd.f32 %v521, %v1385
        %v1474 = vadd.f32 %v522, %v1387
        %v1475 = vadd.f32 %v523, %v1467
        %v1476 = vadd.f32 %v524, %v1469
        %1477 = vst [vmem:[#allocation2] sm:$0xff] %v1473
        %1478 = vst [vmem:[#allocation2 + $0x8] sm:$0xff] %v1474
        %1479 = vst [vmem:[#allocation2 + $0x10] sm:$0xff] %v1475
        %1480 = vst [vmem:[#allocation2 + $0x18] sm:$0xff] %v1476
        %p1481 = scmp.eq.s32.totalorder %s34, 1
        // Predicated region
        $region97: #{tpu_custom_call.1} parent=59 // pred_check
          %p1482 = pneg %p1481
        $region98: #{tpu_custom_call.1} parent=59 // pred_check_branch
          %1484 = sbr.rel (%p1482) target = $region100
        $region99: #{tpu_custom_call.1} parent=59 // pred_region
          %v1485 = vld [vmem:[#allocation2] sm:$0xff]
          %v1486 = vld [vmem:[#allocation2 + $0x8] sm:$0xff]
          %v1487 = vld [vmem:[#allocation2 + $0x10] sm:$0xff]
          %v1488 = vld [vmem:[#allocation2 + $0x18] sm:$0xff]
          %v1489 = vld [vmem:[#allocation8] sm:$0xf]
          %v1491 = vlaneseq
          %v1492 = vshrl.u32 %v1491, 7
          %v1493 = vsub.s32 0, %v1492
          %v1494 = vrot.slane %v1489, %v1493
          %v1495 = vlaneseq
          %v1496 = vshrl.u32 %v1495, 7
          %v1497 = vsub.s32 1, %v1496
          %v1498 = vrot.slane %v1489, %v1497
          %v1499 = vlaneseq
          %v1500 = vshrl.u32 %v1499, 7
          %v1501 = vsub.s32 2, %v1500
          %v1502 = vrot.slane %v1489, %v1501
          %v1503 = vlaneseq
          %v1504 = vshrl.u32 %v1503, 7
          %v1505 = vsub.s32 3, %v1504
          %v1506 = vrot.slane %v1489, %v1505
          %v1511 = vadd.f32 %v1485, %v1494
          %v1512 = vadd.f32 %v1486, %v1498
          %v1513 = vadd.f32 %v1487, %v1502
          %v1514 = vadd.f32 %v1488, %v1506
          %1515 = vst [vmem:[#allocation17] sm:$0xff] %v1511
          %1516 = vst [vmem:[#allocation17 + $0x8] sm:$0xff] %v1512
          %1517 = vst [vmem:[#allocation17 + $0x10] sm:$0xff] %v1513
          %1518 = vst [vmem:[#allocation17 + $0x18] sm:$0xff] %v1514
          %v1519 = vpack.c.bf16 %v1511, %v1511
          %v1520 = vpack.c.bf16 %v1512, %v1512
          %v1521 = vpack.c.bf16 %v1513, %v1513
          %v1522 = vpack.c.bf16 %v1514, %v1514
          %v1523 = vld [vmem:[#allocation9] sm:$0xff]
          %v1524 = vld [vmem:[#allocation9 + $0x8] sm:$0xff]
          %v1525 = vld [vmem:[#allocation9 + $0x10] sm:$0xff]
          %v1526 = vld [vmem:[#allocation9 + $0x18] sm:$0xff]
          %v1527 = vld [vmem:[#allocation9 + $0x20] sm:$0xff]
          %v1528 = vld [vmem:[#allocation9 + $0x28] sm:$0xff]
          %v1529 = vld [vmem:[#allocation9 + $0x30] sm:$0xff]
          %v1530 = vld [vmem:[#allocation9 + $0x38] sm:$0xff]
          %v1531 = vld [vmem:[#allocation9 + $0x40] sm:$0xff]
          %v1532 = vld [vmem:[#allocation9 + $0x48] sm:$0xff]
          %v1533 = vld [vmem:[#allocation9 + $0x50] sm:$0xff]
          %v1534 = vld [vmem:[#allocation9 + $0x58] sm:$0xff]
          %v1535 = vld [vmem:[#allocation9 + $0x60] sm:$0xff]
          %v1536 = vld [vmem:[#allocation9 + $0x68] sm:$0xff]
          %v1537 = vld [vmem:[#allocation9 + $0x70] sm:$0xff]
          %v1538 = vld [vmem:[#allocation9 + $0x78] sm:$0xff]
          %v1539 = vld [vmem:[#allocation9 + $0x80] sm:$0xff]
          %v1540 = vld [vmem:[#allocation9 + $0x88] sm:$0xff]
          %v1541 = vld [vmem:[#allocation9 + $0x90] sm:$0xff]
          %v1542 = vld [vmem:[#allocation9 + $0x98] sm:$0xff]
          %v1543 = vld [vmem:[#allocation9 + $0xa0] sm:$0xff]
          %v1544 = vld [vmem:[#allocation9 + $0xa8] sm:$0xff]
          %v1545 = vld [vmem:[#allocation9 + $0xb0] sm:$0xff]
          %v1546 = vld [vmem:[#allocation9 + $0xb8] sm:$0xff]
          %v1547 = vld [vmem:[#allocation9 + $0xc0] sm:$0xff]
          %v1548 = vld [vmem:[#allocation9 + $0xc8] sm:$0xff]
          %v1549 = vld [vmem:[#allocation9 + $0xd0] sm:$0xff]
          %v1550 = vld [vmem:[#allocation9 + $0xd8] sm:$0xff]
          %v1551 = vld [vmem:[#allocation9 + $0xe0] sm:$0xff]
          %v1552 = vld [vmem:[#allocation9 + $0xe8] sm:$0xff]
          %v1553 = vld [vmem:[#allocation9 + $0xf0] sm:$0xff]
          %v1554 = vld [vmem:[#allocation9 + $0xf8] sm:$0xff]
          %v1555 = vld [vmem:[#allocation9 + $0x100] sm:$0xff]
          %v1556 = vld [vmem:[#allocation9 + $0x108] sm:$0xff]
          %v1557 = vld [vmem:[#allocation9 + $0x110] sm:$0xff]
          %v1558 = vld [vmem:[#allocation9 + $0x118] sm:$0xff]
          %v1559 = vld [vmem:[#allocation9 + $0x120] sm:$0xff]
          %v1560 = vld [vmem:[#allocation9 + $0x128] sm:$0xff]
          %v1561 = vld [vmem:[#allocation9 + $0x130] sm:$0xff]
          %v1562 = vld [vmem:[#allocation9 + $0x138] sm:$0xff]
          %v1563 = vld [vmem:[#allocation9 + $0x140] sm:$0xff]
          %v1564 = vld [vmem:[#allocation9 + $0x148] sm:$0xff]
          %v1565 = vld [vmem:[#allocation9 + $0x150] sm:$0xff]
          %v1566 = vld [vmem:[#allocation9 + $0x158] sm:$0xff]
          %v1567 = vld [vmem:[#allocation9 + $0x160] sm:$0xff]
          %v1568 = vld [vmem:[#allocation9 + $0x168] sm:$0xff]
          %v1569 = vld [vmem:[#allocation9 + $0x170] sm:$0xff]
          %v1570 = vld [vmem:[#allocation9 + $0x178] sm:$0xff]
          %v1571 = vld [vmem:[#allocation9 + $0x180] sm:$0xff]
          %v1572 = vld [vmem:[#allocation9 + $0x188] sm:$0xff]
          %v1573 = vld [vmem:[#allocation9 + $0x190] sm:$0xff]
          %v1574 = vld [vmem:[#allocation9 + $0x198] sm:$0xff]
          %v1575 = vld [vmem:[#allocation9 + $0x1a0] sm:$0xff]
          %v1576 = vld [vmem:[#allocation9 + $0x1a8] sm:$0xff]
          %v1577 = vld [vmem:[#allocation9 + $0x1b0] sm:$0xff]
          %v1578 = vld [vmem:[#allocation9 + $0x1b8] sm:$0xff]
          %v1579 = vld [vmem:[#allocation9 + $0x1c0] sm:$0xff]
          %v1580 = vld [vmem:[#allocation9 + $0x1c8] sm:$0xff]
          %v1581 = vld [vmem:[#allocation9 + $0x1d0] sm:$0xff]
          %v1582 = vld [vmem:[#allocation9 + $0x1d8] sm:$0xff]
          %v1583 = vld [vmem:[#allocation9 + $0x1e0] sm:$0xff]
          %v1584 = vld [vmem:[#allocation9 + $0x1e8] sm:$0xff]
          %v1585 = vld [vmem:[#allocation9 + $0x1f0] sm:$0xff]
          %v1586 = vld [vmem:[#allocation9 + $0x1f8] sm:$0xff]
          %v1587 = vld [vmem:[#allocation9 + $0x200] sm:$0xff]
          %v1588 = vld [vmem:[#allocation9 + $0x208] sm:$0xff]
          %v1589 = vld [vmem:[#allocation9 + $0x210] sm:$0xff]
          %v1590 = vld [vmem:[#allocation9 + $0x218] sm:$0xff]
          %v1591 = vld [vmem:[#allocation9 + $0x220] sm:$0xff]
          %v1592 = vld [vmem:[#allocation9 + $0x228] sm:$0xff]
          %v1593 = vld [vmem:[#allocation9 + $0x230] sm:$0xff]
          %v1594 = vld [vmem:[#allocation9 + $0x238] sm:$0xff]
          %v1595 = vld [vmem:[#allocation9 + $0x240] sm:$0xff]
          %v1596 = vld [vmem:[#allocation9 + $0x248] sm:$0xff]
          %v1597 = vld [vmem:[#allocation9 + $0x250] sm:$0xff]
          %v1598 = vld [vmem:[#allocation9 + $0x258] sm:$0xff]
          %v1599 = vld [vmem:[#allocation9 + $0x260] sm:$0xff]
          %v1600 = vld [vmem:[#allocation9 + $0x268] sm:$0xff]
          %v1601 = vld [vmem:[#allocation9 + $0x270] sm:$0xff]
          %v1602 = vld [vmem:[#allocation9 + $0x278] sm:$0xff]
          %v1603 = vld [vmem:[#allocation9 + $0x280] sm:$0xff]
          %v1604 = vld [vmem:[#allocation9 + $0x288] sm:$0xff]
          %v1605 = vld [vmem:[#allocation9 + $0x290] sm:$0xff]
          %v1606 = vld [vmem:[#allocation9 + $0x298] sm:$0xff]
          %v1607 = vld [vmem:[#allocation9 + $0x2a0] sm:$0xff]
          %v1608 = vld [vmem:[#allocation9 + $0x2a8] sm:$0xff]
          %v1609 = vld [vmem:[#allocation9 + $0x2b0] sm:$0xff]
          %v1610 = vld [vmem:[#allocation9 + $0x2b8] sm:$0xff]
          %v1611 = vld [vmem:[#allocation9 + $0x2c0] sm:$0xff]
          %v1612 = vld [vmem:[#allocation9 + $0x2c8] sm:$0xff]
          %v1613 = vld [vmem:[#allocation9 + $0x2d0] sm:$0xff]
          %v1614 = vld [vmem:[#allocation9 + $0x2d8] sm:$0xff]
          %v1615 = vld [vmem:[#allocation9 + $0x2e0] sm:$0xff]
          %v1616 = vld [vmem:[#allocation9 + $0x2e8] sm:$0xff]
          %v1617 = vld [vmem:[#allocation9 + $0x2f0] sm:$0xff]
          %v1618 = vld [vmem:[#allocation9 + $0x2f8] sm:$0xff]
          %v1619 = vld [vmem:[#allocation9 + $0x300] sm:$0xff]
          %v1620 = vld [vmem:[#allocation9 + $0x308] sm:$0xff]
          %v1621 = vld [vmem:[#allocation9 + $0x310] sm:$0xff]
          %v1622 = vld [vmem:[#allocation9 + $0x318] sm:$0xff]
          %v1623 = vld [vmem:[#allocation9 + $0x320] sm:$0xff]
          %v1624 = vld [vmem:[#allocation9 + $0x328] sm:$0xff]
          %v1625 = vld [vmem:[#allocation9 + $0x330] sm:$0xff]
          %v1626 = vld [vmem:[#allocation9 + $0x338] sm:$0xff]
          %v1627 = vld [vmem:[#allocation9 + $0x340] sm:$0xff]
          %v1628 = vld [vmem:[#allocation9 + $0x348] sm:$0xff]
          %v1629 = vld [vmem:[#allocation9 + $0x350] sm:$0xff]
          %v1630 = vld [vmem:[#allocation9 + $0x358] sm:$0xff]
          %v1631 = vld [vmem:[#allocation9 + $0x360] sm:$0xff]
          %v1632 = vld [vmem:[#allocation9 + $0x368] sm:$0xff]
          %v1633 = vld [vmem:[#allocation9 + $0x370] sm:$0xff]
          %v1634 = vld [vmem:[#allocation9 + $0x378] sm:$0xff]
          %v1635 = vld [vmem:[#allocation9 + $0x380] sm:$0xff]
          %v1636 = vld [vmem:[#allocation9 + $0x388] sm:$0xff]
          %v1637 = vld [vmem:[#allocation9 + $0x390] sm:$0xff]
          %v1638 = vld [vmem:[#allocation9 + $0x398] sm:$0xff]
          %v1639 = vld [vmem:[#allocation9 + $0x3a0] sm:$0xff]
          %v1640 = vld [vmem:[#allocation9 + $0x3a8] sm:$0xff]
          %v1641 = vld [vmem:[#allocation9 + $0x3b0] sm:$0xff]
          %v1642 = vld [vmem:[#allocation9 + $0x3b8] sm:$0xff]
          %v1643 = vld [vmem:[#allocation9 + $0x3c0] sm:$0xff]
          %v1644 = vld [vmem:[#allocation9 + $0x3c8] sm:$0xff]
          %v1645 = vld [vmem:[#allocation9 + $0x3d0] sm:$0xff]
          %v1646 = vld [vmem:[#allocation9 + $0x3d8] sm:$0xff]
          %v1647 = vld [vmem:[#allocation9 + $0x3e0] sm:$0xff]
          %v1648 = vld [vmem:[#allocation9 + $0x3e8] sm:$0xff]
          %v1649 = vld [vmem:[#allocation9 + $0x3f0] sm:$0xff]
          %v1650 = vld [vmem:[#allocation9 + $0x3f8] sm:$0xff]
          %v1651 = vld [vmem:[#allocation11] sm:$0xf]
          %v1653 = vlaneseq
          %v1654 = vshrl.u32 %v1653, 7
          %v1655 = vsub.s32 0, %v1654
          %v1656 = vrot.slane %v1651, %v1655
          %v1657 = vlaneseq
          %v1658 = vshrl.u32 %v1657, 7
          %v1659 = vsub.s32 1, %v1658
          %v1660 = vrot.slane %v1651, %v1659
          %v1661 = vlaneseq
          %v1662 = vshrl.u32 %v1661, 7
          %v1663 = vsub.s32 2, %v1662
          %v1664 = vrot.slane %v1651, %v1663
          %v1665 = vlaneseq
          %v1666 = vshrl.u32 %v1665, 7
          %v1667 = vsub.s32 3, %v1666
          %v1668 = vrot.slane %v1651, %v1667
          %v1801 = vunpack.c.l.b16 %v1523
          %v1802 = vunpack.c.h.b16 %v1523
          %v1803 = vunpack.c.l.b16 %v1524
          %v1804 = vunpack.c.h.b16 %v1524
          %v1805 = vunpack.c.l.b16 %v1525
          %v1806 = vunpack.c.h.b16 %v1525
          %v1807 = vunpack.c.l.b16 %v1526
          %v1808 = vunpack.c.h.b16 %v1526
          %v1809 = vunpack.c.l.b16 %v1527
          %v1810 = vunpack.c.h.b16 %v1527
          %v1811 = vunpack.c.l.b16 %v1528
          %v1812 = vunpack.c.h.b16 %v1528
          %v1813 = vunpack.c.l.b16 %v1529
          %v1814 = vunpack.c.h.b16 %v1529
          %v1815 = vunpack.c.l.b16 %v1530
          %v1816 = vunpack.c.h.b16 %v1530
          %v1817 = vunpack.c.l.b16 %v1531
          %v1818 = vunpack.c.h.b16 %v1531
          %v1819 = vunpack.c.l.b16 %v1532
          %v1820 = vunpack.c.h.b16 %v1532
          %v1821 = vunpack.c.l.b16 %v1533
          %v1822 = vunpack.c.h.b16 %v1533
          %v1823 = vunpack.c.l.b16 %v1534
          %v1824 = vunpack.c.h.b16 %v1534
          %v1825 = vunpack.c.l.b16 %v1535
          %v1826 = vunpack.c.h.b16 %v1535
          %v1827 = vunpack.c.l.b16 %v1536
          %v1828 = vunpack.c.h.b16 %v1536
          %v1829 = vunpack.c.l.b16 %v1537
          %v1830 = vunpack.c.h.b16 %v1537
          %v1831 = vunpack.c.l.b16 %v1538
          %v1832 = vunpack.c.h.b16 %v1538
          %v1833 = vunpack.c.l.b16 %v1539
          %v1834 = vunpack.c.h.b16 %v1539
          %v1835 = vunpack.c.l.b16 %v1540
          %v1836 = vunpack.c.h.b16 %v1540
          %v1837 = vunpack.c.l.b16 %v1541
          %v1838 = vunpack.c.h.b16 %v1541
          %v1839 = vunpack.c.l.b16 %v1542
          %v1840 = vunpack.c.h.b16 %v1542
          %v1841 = vunpack.c.l.b16 %v1543
          %v1842 = vunpack.c.h.b16 %v1543
          %v1843 = vunpack.c.l.b16 %v1544
          %v1844 = vunpack.c.h.b16 %v1544
          %v1845 = vunpack.c.l.b16 %v1545
          %v1846 = vunpack.c.h.b16 %v1545
          %v1847 = vunpack.c.l.b16 %v1546
          %v1848 = vunpack.c.h.b16 %v1546
          %v1849 = vunpack.c.l.b16 %v1547
          %v1850 = vunpack.c.h.b16 %v1547
          %v1851 = vunpack.c.l.b16 %v1548
          %v1852 = vunpack.c.h.b16 %v1548
          %v1853 = vunpack.c.l.b16 %v1549
          %v1854 = vunpack.c.h.b16 %v1549
          %v1855 = vunpack.c.l.b16 %v1550
          %v1856 = vunpack.c.h.b16 %v1550
          %v1857 = vunpack.c.l.b16 %v1551
          %v1858 = vunpack.c.h.b16 %v1551
          %v1859 = vunpack.c.l.b16 %v1552
          %v1860 = vunpack.c.h.b16 %v1552
          %v1861 = vunpack.c.l.b16 %v1553
          %v1862 = vunpack.c.h.b16 %v1553
          %v1863 = vunpack.c.l.b16 %v1554
          %v1864 = vunpack.c.h.b16 %v1554
          %v1865 = vunpack.c.l.b16 %v1555
          %v1866 = vunpack.c.h.b16 %v1555
          %v1867 = vunpack.c.l.b16 %v1556
          %v1868 = vunpack.c.h.b16 %v1556
          %v1869 = vunpack.c.l.b16 %v1557
          %v1870 = vunpack.c.h.b16 %v1557
          %v1871 = vunpack.c.l.b16 %v1558
          %v1872 = vunpack.c.h.b16 %v1558
          %v1873 = vunpack.c.l.b16 %v1559
          %v1874 = vunpack.c.h.b16 %v1559
          %v1875 = vunpack.c.l.b16 %v1560
          %v1876 = vunpack.c.h.b16 %v1560
          %v1877 = vunpack.c.l.b16 %v1561
          %v1878 = vunpack.c.h.b16 %v1561
          %v1879 = vunpack.c.l.b16 %v1562
          %v1880 = vunpack.c.h.b16 %v1562
          %v1881 = vunpack.c.l.b16 %v1563
          %v1882 = vunpack.c.h.b16 %v1563
          %v1883 = vunpack.c.l.b16 %v1564
          %v1884 = vunpack.c.h.b16 %v1564
          %v1885 = vunpack.c.l.b16 %v1565
          %v1886 = vunpack.c.h.b16 %v1565
          %v1887 = vunpack.c.l.b16 %v1566
          %v1888 = vunpack.c.h.b16 %v1566
          %v1889 = vunpack.c.l.b16 %v1567
          %v1890 = vunpack.c.h.b16 %v1567
          %v1891 = vunpack.c.l.b16 %v1568
          %v1892 = vunpack.c.h.b16 %v1568
          %v1893 = vunpack.c.l.b16 %v1569
          %v1894 = vunpack.c.h.b16 %v1569
          %v1895 = vunpack.c.l.b16 %v1570
          %v1896 = vunpack.c.h.b16 %v1570
          %v1897 = vunpack.c.l.b16 %v1571
          %v1898 = vunpack.c.h.b16 %v1571
          %v1899 = vunpack.c.l.b16 %v1572
          %v1900 = vunpack.c.h.b16 %v1572
          %v1901 = vunpack.c.l.b16 %v1573
          %v1902 = vunpack.c.h.b16 %v1573
          %v1903 = vunpack.c.l.b16 %v1574
          %v1904 = vunpack.c.h.b16 %v1574
          %v1905 = vunpack.c.l.b16 %v1575
          %v1906 = vunpack.c.h.b16 %v1575
          %v1907 = vunpack.c.l.b16 %v1576
          %v1908 = vunpack.c.h.b16 %v1576
          %v1909 = vunpack.c.l.b16 %v1577
          %v1910 = vunpack.c.h.b16 %v1577
          %v1911 = vunpack.c.l.b16 %v1578
          %v1912 = vunpack.c.h.b16 %v1578
          %v1913 = vunpack.c.l.b16 %v1579
          %v1914 = vunpack.c.h.b16 %v1579
          %v1915 = vunpack.c.l.b16 %v1580
          %v1916 = vunpack.c.h.b16 %v1580
          %v1917 = vunpack.c.l.b16 %v1581
          %v1918 = vunpack.c.h.b16 %v1581
          %v1919 = vunpack.c.l.b16 %v1582
          %v1920 = vunpack.c.h.b16 %v1582
          %v1921 = vunpack.c.l.b16 %v1583
          %v1922 = vunpack.c.h.b16 %v1583
          %v1923 = vunpack.c.l.b16 %v1584
          %v1924 = vunpack.c.h.b16 %v1584
          %v1925 = vunpack.c.l.b16 %v1585
          %v1926 = vunpack.c.h.b16 %v1585
          %v1927 = vunpack.c.l.b16 %v1586
          %v1928 = vunpack.c.h.b16 %v1586
          %v1929 = vunpack.c.l.b16 %v1587
          %v1930 = vunpack.c.h.b16 %v1587
          %v1931 = vunpack.c.l.b16 %v1588
          %v1932 = vunpack.c.h.b16 %v1588
          %v1933 = vunpack.c.l.b16 %v1589
          %v1934 = vunpack.c.h.b16 %v1589
          %v1935 = vunpack.c.l.b16 %v1590
          %v1936 = vunpack.c.h.b16 %v1590
          %v1937 = vunpack.c.l.b16 %v1591
          %v1938 = vunpack.c.h.b16 %v1591
          %v1939 = vunpack.c.l.b16 %v1592
          %v1940 = vunpack.c.h.b16 %v1592
          %v1941 = vunpack.c.l.b16 %v1593
          %v1942 = vunpack.c.h.b16 %v1593
          %v1943 = vunpack.c.l.b16 %v1594
          %v1944 = vunpack.c.h.b16 %v1594
          %v1945 = vunpack.c.l.b16 %v1595
          %v1946 = vunpack.c.h.b16 %v1595
          %v1947 = vunpack.c.l.b16 %v1596
          %v1948 = vunpack.c.h.b16 %v1596
          %v1949 = vunpack.c.l.b16 %v1597
          %v1950 = vunpack.c.h.b16 %v1597
          %v1951 = vunpack.c.l.b16 %v1598
          %v1952 = vunpack.c.h.b16 %v1598
          %v1953 = vunpack.c.l.b16 %v1599
          %v1954 = vunpack.c.h.b16 %v1599
          %v1955 = vunpack.c.l.b16 %v1600
          %v1956 = vunpack.c.h.b16 %v1600
          %v1957 = vunpack.c.l.b16 %v1601
          %v1958 = vunpack.c.h.b16 %v1601
          %v1959 = vunpack.c.l.b16 %v1602
          %v1960 = vunpack.c.h.b16 %v1602
          %v1961 = vunpack.c.l.b16 %v1603
          %v1962 = vunpack.c.h.b16 %v1603
          %v1963 = vunpack.c.l.b16 %v1604
          %v1964 = vunpack.c.h.b16 %v1604
          %v1965 = vunpack.c.l.b16 %v1605
          %v1966 = vunpack.c.h.b16 %v1605
          %v1967 = vunpack.c.l.b16 %v1606
          %v1968 = vunpack.c.h.b16 %v1606
          %v1969 = vunpack.c.l.b16 %v1607
          %v1970 = vunpack.c.h.b16 %v1607
          %v1971 = vunpack.c.l.b16 %v1608
          %v1972 = vunpack.c.h.b16 %v1608
          %v1973 = vunpack.c.l.b16 %v1609
          %v1974 = vunpack.c.h.b16 %v1609
          %v1975 = vunpack.c.l.b16 %v1610
          %v1976 = vunpack.c.h.b16 %v1610
          %v1977 = vunpack.c.l.b16 %v1611
          %v1978 = vunpack.c.h.b16 %v1611
          %v1979 = vunpack.c.l.b16 %v1612
          %v1980 = vunpack.c.h.b16 %v1612
          %v1981 = vunpack.c.l.b16 %v1613
          %v1982 = vunpack.c.h.b16 %v1613
          %v1983 = vunpack.c.l.b16 %v1614
          %v1984 = vunpack.c.h.b16 %v1614
          %v1985 = vunpack.c.l.b16 %v1615
          %v1986 = vunpack.c.h.b16 %v1615
          %v1987 = vunpack.c.l.b16 %v1616
          %v1988 = vunpack.c.h.b16 %v1616
          %v1989 = vunpack.c.l.b16 %v1617
          %v1990 = vunpack.c.h.b16 %v1617
          %v1991 = vunpack.c.l.b16 %v1618
          %v1992 = vunpack.c.h.b16 %v1618
          %v1993 = vunpack.c.l.b16 %v1619
          %v1994 = vunpack.c.h.b16 %v1619
          %v1995 = vunpack.c.l.b16 %v1620
          %v1996 = vunpack.c.h.b16 %v1620
          %v1997 = vunpack.c.l.b16 %v1621
          %v1998 = vunpack.c.h.b16 %v1621
          %v1999 = vunpack.c.l.b16 %v1622
          %v2000 = vunpack.c.h.b16 %v1622
          %v2001 = vunpack.c.l.b16 %v1623
          %v2002 = vunpack.c.h.b16 %v1623
          %v2003 = vunpack.c.l.b16 %v1624
          %v2004 = vunpack.c.h.b16 %v1624
          %v2005 = vunpack.c.l.b16 %v1625
          %v2006 = vunpack.c.h.b16 %v1625
          %v2007 = vunpack.c.l.b16 %v1626
          %v2008 = vunpack.c.h.b16 %v1626
          %v2009 = vunpack.c.l.b16 %v1627
          %v2010 = vunpack.c.h.b16 %v1627
          %v2011 = vunpack.c.l.b16 %v1628
          %v2012 = vunpack.c.h.b16 %v1628
          %v2013 = vunpack.c.l.b16 %v1629
          %v2014 = vunpack.c.h.b16 %v1629
          %v2015 = vunpack.c.l.b16 %v1630
          %v2016 = vunpack.c.h.b16 %v1630
          %v2017 = vunpack.c.l.b16 %v1631
          %v2018 = vunpack.c.h.b16 %v1631
          %v2019 = vunpack.c.l.b16 %v1632
          %v2020 = vunpack.c.h.b16 %v1632
          %v2021 = vunpack.c.l.b16 %v1633
          %v2022 = vunpack.c.h.b16 %v1633
          %v2023 = vunpack.c.l.b16 %v1634
          %v2024 = vunpack.c.h.b16 %v1634
          %v2025 = vunpack.c.l.b16 %v1635
          %v2026 = vunpack.c.h.b16 %v1635
          %v2027 = vunpack.c.l.b16 %v1636
          %v2028 = vunpack.c.h.b16 %v1636
          %v2029 = vunpack.c.l.b16 %v1637
          %v2030 = vunpack.c.h.b16 %v1637
          %v2031 = vunpack.c.l.b16 %v1638
          %v2032 = vunpack.c.h.b16 %v1638
          %v2033 = vunpack.c.l.b16 %v1639
          %v2034 = vunpack.c.h.b16 %v1639
          %v2035 = vunpack.c.l.b16 %v1640
          %v2036 = vunpack.c.h.b16 %v1640
          %v2037 = vunpack.c.l.b16 %v1641
          %v2038 = vunpack.c.h.b16 %v1641
          %v2039 = vunpack.c.l.b16 %v1642
          %v2040 = vunpack.c.h.b16 %v1642
          %v2041 = vunpack.c.l.b16 %v1643
          %v2042 = vunpack.c.h.b16 %v1643
          %v2043 = vunpack.c.l.b16 %v1644
          %v2044 = vunpack.c.h.b16 %v1644
          %v2045 = vunpack.c.l.b16 %v1645
          %v2046 = vunpack.c.h.b16 %v1645
          %v2047 = vunpack.c.l.b16 %v1646
          %v2048 = vunpack.c.h.b16 %v1646
          %v2049 = vunpack.c.l.b16 %v1647
          %v2050 = vunpack.c.h.b16 %v1647
          %v2051 = vunpack.c.l.b16 %v1648
          %v2052 = vunpack.c.h.b16 %v1648
          %v2053 = vunpack.c.l.b16 %v1649
          %v2054 = vunpack.c.h.b16 %v1649
          %v2055 = vunpack.c.l.b16 %v1650
          %v2056 = vunpack.c.h.b16 %v1650
          %v2057 = vpack.c.b16 %v1805, %v1801
          %v2058 = vpack.c.b16 %v1806, %v1802
          %v2059 = vpack.c.b16 %v1807, %v1803
          %v2060 = vpack.c.b16 %v1808, %v1804
          %v2061 = vpack.c.b16 %v1813, %v1809
          %v2062 = vpack.c.b16 %v1814, %v1810
          %v2063 = vpack.c.b16 %v1815, %v1811
          %v2064 = vpack.c.b16 %v1816, %v1812
          %v2065 = vpack.c.b16 %v1821, %v1817
          %v2066 = vpack.c.b16 %v1822, %v1818
          %v2067 = vpack.c.b16 %v1823, %v1819
          %v2068 = vpack.c.b16 %v1824, %v1820
          %v2069 = vpack.c.b16 %v1829, %v1825
          %v2070 = vpack.c.b16 %v1830, %v1826
          %v2071 = vpack.c.b16 %v1831, %v1827
          %v2072 = vpack.c.b16 %v1832, %v1828
          %v2073 = vpack.c.b16 %v1837, %v1833
          %v2074 = vpack.c.b16 %v1838, %v1834
          %v2075 = vpack.c.b16 %v1839, %v1835
          %v2076 = vpack.c.b16 %v1840, %v1836
          %v2077 = vpack.c.b16 %v1845, %v1841
          %v2078 = vpack.c.b16 %v1846, %v1842
          %v2079 = vpack.c.b16 %v1847, %v1843
          %v2080 = vpack.c.b16 %v1848, %v1844
          %v2081 = vpack.c.b16 %v1853, %v1849
          %v2082 = vpack.c.b16 %v1854, %v1850
          %v2083 = vpack.c.b16 %v1855, %v1851
          %v2084 = vpack.c.b16 %v1856, %v1852
          %v2085 = vpack.c.b16 %v1861, %v1857
          %v2086 = vpack.c.b16 %v1862, %v1858
          %v2087 = vpack.c.b16 %v1863, %v1859
          %v2088 = vpack.c.b16 %v1864, %v1860
          %v2089 = vpack.c.b16 %v1869, %v1865
          %v2090 = vpack.c.b16 %v1870, %v1866
          %v2091 = vpack.c.b16 %v1871, %v1867
          %v2092 = vpack.c.b16 %v1872, %v1868
          %v2093 = vpack.c.b16 %v1877, %v1873
          %v2094 = vpack.c.b16 %v1878, %v1874
          %v2095 = vpack.c.b16 %v1879, %v1875
          %v2096 = vpack.c.b16 %v1880, %v1876
          %v2097 = vpack.c.b16 %v1885, %v1881
          %v2098 = vpack.c.b16 %v1886, %v1882
          %v2099 = vpack.c.b16 %v1887, %v1883
          %v2100 = vpack.c.b16 %v1888, %v1884
          %v2101 = vpack.c.b16 %v1893, %v1889
          %v2102 = vpack.c.b16 %v1894, %v1890
          %v2103 = vpack.c.b16 %v1895, %v1891
          %v2104 = vpack.c.b16 %v1896, %v1892
          %v2105 = vpack.c.b16 %v1901, %v1897
          %v2106 = vpack.c.b16 %v1902, %v1898
          %v2107 = vpack.c.b16 %v1903, %v1899
          %v2108 = vpack.c.b16 %v1904, %v1900
          %v2109 = vpack.c.b16 %v1909, %v1905
          %v2110 = vpack.c.b16 %v1910, %v1906
          %v2111 = vpack.c.b16 %v1911, %v1907
          %v2112 = vpack.c.b16 %v1912, %v1908
          %v2113 = vpack.c.b16 %v1917, %v1913
          %v2114 = vpack.c.b16 %v1918, %v1914
          %v2115 = vpack.c.b16 %v1919, %v1915
          %v2116 = vpack.c.b16 %v1920, %v1916
          %v2117 = vpack.c.b16 %v1925, %v1921
          %v2118 = vpack.c.b16 %v1926, %v1922
          %v2119 = vpack.c.b16 %v1927, %v1923
          %v2120 = vpack.c.b16 %v1928, %v1924
          %v2121 = vpack.c.b16 %v1933, %v1929
          %v2122 = vpack.c.b16 %v1934, %v1930
          %v2123 = vpack.c.b16 %v1935, %v1931
          %v2124 = vpack.c.b16 %v1936, %v1932
          %v2125 = vpack.c.b16 %v1941, %v1937
          %v2126 = vpack.c.b16 %v1942, %v1938
          %v2127 = vpack.c.b16 %v1943, %v1939
          %v2128 = vpack.c.b16 %v1944, %v1940
          %v2129 = vpack.c.b16 %v1949, %v1945
          %v2130 = vpack.c.b16 %v1950, %v1946
          %v2131 = vpack.c.b16 %v1951, %v1947
          %v2132 = vpack.c.b16 %v1952, %v1948
          %v2133 = vpack.c.b16 %v1957, %v1953
          %v2134 = vpack.c.b16 %v1958, %v1954
          %v2135 = vpack.c.b16 %v1959, %v1955
          %v2136 = vpack.c.b16 %v1960, %v1956
          %v2137 = vpack.c.b16 %v1965, %v1961
          %v2138 = vpack.c.b16 %v1966, %v1962
          %v2139 = vpack.c.b16 %v1967, %v1963
          %v2140 = vpack.c.b16 %v1968, %v1964
          %v2141 = vpack.c.b16 %v1973, %v1969
          %v2142 = vpack.c.b16 %v1974, %v1970
          %v2143 = vpack.c.b16 %v1975, %v1971
          %v2144 = vpack.c.b16 %v1976, %v1972
          %v2145 = vpack.c.b16 %v1981, %v1977
          %v2146 = vpack.c.b16 %v1982, %v1978
          %v2147 = vpack.c.b16 %v1983, %v1979
          %v2148 = vpack.c.b16 %v1984, %v1980
          %v2149 = vpack.c.b16 %v1989, %v1985
          %v2150 = vpack.c.b16 %v1990, %v1986
          %v2151 = vpack.c.b16 %v1991, %v1987
          %v2152 = vpack.c.b16 %v1992, %v1988
          %v2153 = vpack.c.b16 %v1997, %v1993
          %v2154 = vpack.c.b16 %v1998, %v1994
          %v2155 = vpack.c.b16 %v1999, %v1995
          %v2156 = vpack.c.b16 %v2000, %v1996
          %v2157 = vpack.c.b16 %v2005, %v2001
          %v2158 = vpack.c.b16 %v2006, %v2002
          %v2159 = vpack.c.b16 %v2007, %v2003
          %v2160 = vpack.c.b16 %v2008, %v2004
          %v2161 = vpack.c.b16 %v2013, %v2009
          %v2162 = vpack.c.b16 %v2014, %v2010
          %v2163 = vpack.c.b16 %v2015, %v2011
          %v2164 = vpack.c.b16 %v2016, %v2012
          %v2165 = vpack.c.b16 %v2021, %v2017
          %v2166 = vpack.c.b16 %v2022, %v2018
          %v2167 = vpack.c.b16 %v2023, %v2019
          %v2168 = vpack.c.b16 %v2024, %v2020
          %v2169 = vpack.c.b16 %v2029, %v2025
          %v2170 = vpack.c.b16 %v2030, %v2026
          %v2171 = vpack.c.b16 %v2031, %v2027
          %v2172 = vpack.c.b16 %v2032, %v2028
          %v2173 = vpack.c.b16 %v2037, %v2033
          %v2174 = vpack.c.b16 %v2038, %v2034
          %v2175 = vpack.c.b16 %v2039, %v2035
          %v2176 = vpack.c.b16 %v2040, %v2036
          %v2177 = vpack.c.b16 %v2045, %v2041
          %v2178 = vpack.c.b16 %v2046, %v2042
          %v2179 = vpack.c.b16 %v2047, %v2043
          %v2180 = vpack.c.b16 %v2048, %v2044
          %v2181 = vpack.c.b16 %v2053, %v2049
          %v2182 = vpack.c.b16 %v2054, %v2050
          %v2183 = vpack.c.b16 %v2055, %v2051
          %v2184 = vpack.c.b16 %v2056, %v2052
          %2313 = vmatprep.subr.bf16.mxu0 %v2058
          %2314 = vmatpush1.bf16.msra.mxu0 %v2057
          %2315 = vmatprep.subr.bf16.mxu0 %v2062
          %2316 = vmatpush1.bf16.msra.mxu0 %v2061
          %2317 = vmatprep.subr.bf16.mxu0 %v2066
          %2318 = vmatpush1.bf16.msra.mxu0 %v2065
          %2319 = vmatprep.subr.bf16.mxu0 %v2070
          %2320 = vmatpush1.bf16.msra.mxu0 %v2069
          %2321 = vmatprep.subr.bf16.mxu0 %v2074
          %2322 = vmatpush1.bf16.msra.mxu0 %v2073
          %2323 = vmatprep.subr.bf16.mxu0 %v2078
          %2324 = vmatpush1.bf16.msra.mxu0 %v2077
          %2325 = vmatprep.subr.bf16.mxu0 %v2082
          %2326 = vmatpush1.bf16.msra.mxu0 %v2081
          %2327 = vmatprep.subr.bf16.mxu0 %v2086
          %2328 = vmatpush1.bf16.msra.mxu0 %v2085
          %2329 = vmatprep.subr.bf16.mxu0 %v2090
          %2330 = vmatpush1.bf16.msra.mxu0 %v2089
          %2331 = vmatprep.subr.bf16.mxu0 %v2094
          %2332 = vmatpush1.bf16.msra.mxu0 %v2093
          %2333 = vmatprep.subr.bf16.mxu0 %v2098
          %2334 = vmatpush1.bf16.msra.mxu0 %v2097
          %2335 = vmatprep.subr.bf16.mxu0 %v2102
          %2336 = vmatpush1.bf16.msra.mxu0 %v2101
          %2337 = vmatprep.subr.bf16.mxu0 %v2106
          %2338 = vmatpush1.bf16.msra.mxu0 %v2105
          %2339 = vmatprep.subr.bf16.mxu0 %v2110
          %2340 = vmatpush1.bf16.msra.mxu0 %v2109
          %2341 = vmatprep.subr.bf16.mxu0 %v2114
          %2342 = vmatpush1.bf16.msra.mxu0 %v2113
          %2343 = vmatprep.subr.bf16.mxu0 %v2118
          %2344 = vmatpush1.bf16.msra.mxu0 %v2117
          %2345 = vmatprep.mubr.bf16.mxu0 %v1520
          %2346 = vmatmul.mubr.bf16.gmra.mrb[0].mxu0 %v1519
          %v2347 = vpop.f32.mrb[0].mxu0
          %v2348 = vadd.f32 %v1656, %v2347
          %v2349 = vpop.f32.mrb[0].mxu0
          %v2350 = vadd.f32 %v1660, %v2349
          %v2351 = vpop.f32.mrb[0].mxu0
          %v2352 = vpop.f32.mrb[0].mxu0
          %2353 = vdwg.mxu0
          %2354 = vmatprep.subr.bf16.mxu0 %v2122
          %2355 = vmatpush1.bf16.msra.mxu0 %v2121
          %2356 = vmatprep.subr.bf16.mxu0 %v2126
          %2357 = vmatpush1.bf16.msra.mxu0 %v2125
          %2358 = vmatprep.subr.bf16.mxu0 %v2130
          %2359 = vmatpush1.bf16.msra.mxu0 %v2129
          %2360 = vmatprep.subr.bf16.mxu0 %v2134
          %2361 = vmatpush1.bf16.msra.mxu0 %v2133
          %2362 = vmatprep.subr.bf16.mxu0 %v2138
          %2363 = vmatpush1.bf16.msra.mxu0 %v2137
          %2364 = vmatprep.subr.bf16.mxu0 %v2142
          %2365 = vmatpush1.bf16.msra.mxu0 %v2141
          %2366 = vmatprep.subr.bf16.mxu0 %v2146
          %2367 = vmatpush1.bf16.msra.mxu0 %v2145
          %2368 = vmatprep.subr.bf16.mxu0 %v2150
          %2369 = vmatpush1.bf16.msra.mxu0 %v2149
          %2370 = vmatprep.subr.bf16.mxu0 %v2154
          %2371 = vmatpush1.bf16.msra.mxu0 %v2153
          %2372 = vmatprep.subr.bf16.mxu0 %v2158
          %2373 = vmatpush1.bf16.msra.mxu0 %v2157
          %2374 = vmatprep.subr.bf16.mxu0 %v2162
          %2375 = vmatpush1.bf16.msra.mxu0 %v2161
          %2376 = vmatprep.subr.bf16.mxu0 %v2166
          %2377 = vmatpush1.bf16.msra.mxu0 %v2165
          %2378 = vmatprep.subr.bf16.mxu0 %v2170
          %2379 = vmatpush1.bf16.msra.mxu0 %v2169
          %2380 = vmatprep.subr.bf16.mxu0 %v2174
          %2381 = vmatpush1.bf16.msra.mxu0 %v2173
          %2382 = vmatprep.subr.bf16.mxu0 %v2178
          %2383 = vmatpush1.bf16.msra.mxu0 %v2177
          %2384 = vmatprep.subr.bf16.mxu0 %v2182
          %2385 = vmatpush1.bf16.msra.mxu0 %v2181
          %2386 = vmatprep.mubr.bf16.mxu0 %v1522
          %2387 = vmatmul.mubr.bf16.gmra.mrb[0].mxu0 %v1521
          %v2388 = vpop.f32.mrb[0].mxu0
          %v2389 = vadd.f32 %v2348, %v2388
          %v2390 = vpop.f32.mrb[0].mxu0
          %v2391 = vadd.f32 %v2350, %v2390
          %v2392 = vpop.f32.mrb[0].mxu0
          %v2393 = vpop.f32.mrb[0].mxu0
          %2394 = vdwg.mxu0
          %2395 = vmatprep.subr.bf16.mxu0 %v2060
          %2396 = vmatpush1.bf16.msra.mxu0 %v2059
          %2397 = vmatprep.subr.bf16.mxu0 %v2064
          %2398 = vmatpush1.bf16.msra.mxu0 %v2063
          %2399 = vmatprep.subr.bf16.mxu0 %v2068
          %2400 = vmatpush1.bf16.msra.mxu0 %v2067
          %2401 = vmatprep.subr.bf16.mxu0 %v2072
          %2402 = vmatpush1.bf16.msra.mxu0 %v2071
          %2403 = vmatprep.subr.bf16.mxu0 %v2076
          %2404 = vmatpush1.bf16.msra.mxu0 %v2075
          %2405 = vmatprep.subr.bf16.mxu0 %v2080
          %2406 = vmatpush1.bf16.msra.mxu0 %v2079
          %2407 = vmatprep.subr.bf16.mxu0 %v2084
          %2408 = vmatpush1.bf16.msra.mxu0 %v2083
          %2409 = vmatprep.subr.bf16.mxu0 %v2088
          %2410 = vmatpush1.bf16.msra.mxu0 %v2087
          %2411 = vmatprep.subr.bf16.mxu0 %v2092
          %2412 = vmatpush1.bf16.msra.mxu0 %v2091
          %2413 = vmatprep.subr.bf16.mxu0 %v2096
          %2414 = vmatpush1.bf16.msra.mxu0 %v2095
          %2415 = vmatprep.subr.bf16.mxu0 %v2100
          %2416 = vmatpush1.bf16.msra.mxu0 %v2099
          %2417 = vmatprep.subr.bf16.mxu0 %v2104
          %2418 = vmatpush1.bf16.msra.mxu0 %v2103
          %2419 = vmatprep.subr.bf16.mxu0 %v2108
          %2420 = vmatpush1.bf16.msra.mxu0 %v2107
          %2421 = vmatprep.subr.bf16.mxu0 %v2112
          %2422 = vmatpush1.bf16.msra.mxu0 %v2111
          %2423 = vmatprep.subr.bf16.mxu0 %v2116
          %2424 = vmatpush1.bf16.msra.mxu0 %v2115
          %2425 = vmatprep.subr.bf16.mxu0 %v2120
          %2426 = vmatpush1.bf16.msra.mxu0 %v2119
          %2427 = vmatprep.mubr.bf16.mxu0 %v1520
          %2428 = vmatmul.mubr.bf16.gmra.mrb[0].mxu0 %v1519
          %v2429 = vpop.f32.mrb[0].mxu0
          %v2430 = vadd.f32 %v1664, %v2429
          %v2431 = vpop.f32.mrb[0].mxu0
          %v2432 = vadd.f32 %v1668, %v2431
          %v2433 = vpop.f32.mrb[0].mxu0
          %v2434 = vpop.f32.mrb[0].mxu0
          %2435 = vdwg.mxu0
          %2436 = vmatprep.subr.bf16.mxu0 %v2124
          %2437 = vmatpush1.bf16.msra.mxu0 %v2123
          %2438 = vmatprep.subr.bf16.mxu0 %v2128
          %2439 = vmatpush1.bf16.msra.mxu0 %v2127
          %2440 = vmatprep.subr.bf16.mxu0 %v2132
          %2441 = vmatpush1.bf16.msra.mxu0 %v2131
          %2442 = vmatprep.subr.bf16.mxu0 %v2136
          %2443 = vmatpush1.bf16.msra.mxu0 %v2135
          %2444 = vmatprep.subr.bf16.mxu0 %v2140
          %2445 = vmatpush1.bf16.msra.mxu0 %v2139
          %2446 = vmatprep.subr.bf16.mxu0 %v2144
          %2447 = vmatpush1.bf16.msra.mxu0 %v2143
          %2448 = vmatprep.subr.bf16.mxu0 %v2148
          %2449 = vmatpush1.bf16.msra.mxu0 %v2147
          %2450 = vmatprep.subr.bf16.mxu0 %v2152
          %2451 = vmatpush1.bf16.msra.mxu0 %v2151
          %2452 = vmatprep.subr.bf16.mxu0 %v2156
          %2453 = vmatpush1.bf16.msra.mxu0 %v2155
          %2454 = vmatprep.subr.bf16.mxu0 %v2160
          %2455 = vmatpush1.bf16.msra.mxu0 %v2159
          %2456 = vmatprep.subr.bf16.mxu0 %v2164
          %2457 = vmatpush1.bf16.msra.mxu0 %v2163
          %2458 = vmatprep.subr.bf16.mxu0 %v2168
          %2459 = vmatpush1.bf16.msra.mxu0 %v2167
          %2460 = vmatprep.subr.bf16.mxu0 %v2172
          %2461 = vmatpush1.bf16.msra.mxu0 %v2171
          %2462 = vmatprep.subr.bf16.mxu0 %v2176
          %2463 = vmatpush1.bf16.msra.mxu0 %v2175
          %2464 = vmatprep.subr.bf16.mxu0 %v2180
          %2465 = vmatpush1.bf16.msra.mxu0 %v2179
          %2466 = vmatprep.subr.bf16.mxu0 %v2184
          %2467 = vmatpush1.bf16.msra.mxu0 %v2183
          %2468 = vmatprep.mubr.bf16.mxu0 %v1522
          %2469 = vmatmul.mubr.bf16.gmra.mrb[0].mxu0 %v1521
          %v2470 = vpop.f32.mrb[0].mxu0
          %v2471 = vadd.f32 %v2430, %v2470
          %v2472 = vpop.f32.mrb[0].mxu0
          %v2473 = vadd.f32 %v2432, %v2472
          %v2474 = vpop.f32.mrb[0].mxu0
          %v2475 = vpop.f32.mrb[0].mxu0
          %2476 = vdwg.mxu0
          %v2477 = vlaneseq
          %v2478 = vshrl.u32 %v2477, 7
          %vm2479 = vcmp.lt.s32.totalorder %v2478, 2
          %v2480 = vsel %vm2479, 1, 0
          %v2481 = vcvt.s32.f32 %v2480
          %v2482 = vmul.f32 %v2389, %v2481
          %v2483 = vmul.f32 %v2391, %v2481
          %v2484 = vmul.f32 %v2471, %v2481
          %v2485 = vmul.f32 %v2473, %v2481
          %v2486 = vrot.slane %v2482, 4
          %v2487 = vadd.f32 %v2482, %v2486
          %v2488 = vrot.slane %v2487, 2
          %v2489 = vadd.f32 %v2487, %v2488
          %v2490 = vrot.slane %v2489, 1
          %v2491 = vadd.f32 %v2489, %v2490
          %v2492 = vrot.slane %v2483, 4
          %v2493 = vadd.f32 %v2483, %v2492
          %v2494 = vrot.slane %v2493, 2
          %v2495 = vadd.f32 %v2493, %v2494
          %v2496 = vrot.slane %v2495, 1
          %v2497 = vadd.f32 %v2495, %v2496
          %v2498 = vrot.slane %v2484, 4
          %v2499 = vadd.f32 %v2484, %v2498
          %v2500 = vrot.slane %v2499, 2
          %v2501 = vadd.f32 %v2499, %v2500
          %v2502 = vrot.slane %v2501, 1
          %v2503 = vadd.f32 %v2501, %v2502
          %v2504 = vrot.slane %v2485, 4
          %v2505 = vadd.f32 %v2485, %v2504
          %v2506 = vrot.slane %v2505, 2
          %v2507 = vadd.f32 %v2505, %v2506
          %v2508 = vrot.slane %v2507, 1
          %v2509 = vadd.f32 %v2507, %v2508
          %v2510 = vmul.f32 %v2491, 0.5
          %v2511 = vmul.f32 %v2497, 0.5
          %v2512 = vmul.f32 %v2503, 0.5
          %v2513 = vmul.f32 %v2509, 0.5
          %v2514 = vsub.f32 %v2389, %v2510
          %v2515 = vsub.f32 %v2391, %v2511
          %v2516 = vsub.f32 %v2471, %v2512
          %v2517 = vsub.f32 %v2473, %v2513
          %v2518 = vmul.f32 %v2514, %v2481
          %v2519 = vmul.f32 %v2515, %v2481
          %v2520 = vmul.f32 %v2516, %v2481
          %v2521 = vmul.f32 %v2517, %v2481
          %v2522 = vmul.f32 %v2518, %v2518
          %v2523 = vmul.f32 %v2519, %v2519
          %v2524 = vmul.f32 %v2520, %v2520
          %v2525 = vmul.f32 %v2521, %v2521
          %v2526 = vrot.slane %v2522, 4
          %v2527 = vadd.f32 %v2522, %v2526
          %v2528 = vrot.slane %v2527, 2
          %v2529 = vadd.f32 %v2527, %v2528
          %v2530 = vrot.slane %v2529, 1
          %v2531 = vadd.f32 %v2529, %v2530
          %v2532 = vrot.slane %v2523, 4
          %v2533 = vadd.f32 %v2523, %v2532
          %v2534 = vrot.slane %v2533, 2
          %v2535 = vadd.f32 %v2533, %v2534
          %v2536 = vrot.slane %v2535, 1
          %v2537 = vadd.f32 %v2535, %v2536
          %v2538 = vrot.slane %v2524, 4
          %v2539 = vadd.f32 %v2524, %v2538
          %v2540 = vrot.slane %v2539, 2
          %v2541 = vadd.f32 %v2539, %v2540
          %v2542 = vrot.slane %v2541, 1
          %v2543 = vadd.f32 %v2541, %v2542
          %v2544 = vrot.slane %v2525, 4
          %v2545 = vadd.f32 %v2525, %v2544
          %v2546 = vrot.slane %v2545, 2
          %v2547 = vadd.f32 %v2545, %v2546
          %v2548 = vrot.slane %v2547, 1
          %v2549 = vadd.f32 %v2547, %v2548
          %v2550 = vmul.f32 %v2531, 0.5
          %v2551 = vmul.f32 %v2537, 0.5
          %v2552 = vmul.f32 %v2543, 0.5
          %v2553 = vmul.f32 %v2549, 0.5
          %v2554 = vadd.f32 %v2550, 1e-05
          %v2555 = vadd.f32 %v2551, 1e-05
          %v2556 = vadd.f32 %v2552, 1e-05
          %v2557 = vadd.f32 %v2553, 1e-05
          %v2558 = vrsqrt.pop %v2554
          %v2559 = vrsqrt.pop %v2555
          %v2560 = vrsqrt.pop %v2556
          %v2561 = vrsqrt.pop %v2557
          %v2562 = vmul.f32 %v2514, %v2558
          %v2563 = vmul.f32 %v2515, %v2559
          %v2564 = vmul.f32 %v2516, %v2560
          %v2565 = vmul.f32 %v2517, %v2561
          %v2566 = vld [vmem:[#allocation12] sm:$0xf]
          %v2568 = vlaneseq
          %v2569 = vshrl.u32 %v2568, 7
          %v2570 = vsub.s32 0, %v2569
          %v2571 = vrot.slane %v2566, %v2570
          %v2572 = vlaneseq
          %v2573 = vshrl.u32 %v2572, 7
          %v2574 = vsub.s32 1, %v2573
          %v2575 = vrot.slane %v2566, %v2574
          %v2576 = vlaneseq
          %v2577 = vshrl.u32 %v2576, 7
          %v2578 = vsub.s32 2, %v2577
          %v2579 = vrot.slane %v2566, %v2578
          %v2580 = vlaneseq
          %v2581 = vshrl.u32 %v2580, 7
          %v2582 = vsub.s32 3, %v2581
          %v2583 = vrot.slane %v2566, %v2582
          %v2588 = vmul.f32 %v2562, %v2571
          %v2589 = vmul.f32 %v2563, %v2575
          %v2590 = vmul.f32 %v2564, %v2579
          %v2591 = vmul.f32 %v2565, %v2583
          %v2592 = vld [vmem:[#allocation14] sm:$0xf]
          %v2594 = vlaneseq
          %v2595 = vshrl.u32 %v2594, 7
          %v2596 = vsub.s32 0, %v2595
          %v2597 = vrot.slane %v2592, %v2596
          %v2598 = vlaneseq
          %v2599 = vshrl.u32 %v2598, 7
          %v2600 = vsub.s32 1, %v2599
          %v2601 = vrot.slane %v2592, %v2600
          %v2602 = vlaneseq
          %v2603 = vshrl.u32 %v2602, 7
          %v2604 = vsub.s32 2, %v2603
          %v2605 = vrot.slane %v2592, %v2604
          %v2606 = vlaneseq
          %v2607 = vshrl.u32 %v2606, 7
          %v2608 = vsub.s32 3, %v2607
          %v2609 = vrot.slane %v2592, %v2608
          %v2614 = vadd.f32 %v2588, %v2597
          %v2615 = vadd.f32 %v2589, %v2601
          %v2616 = vadd.f32 %v2590, %v2605
          %v2617 = vadd.f32 %v2591, %v2609
          %v2618 = vmax.f32 %v2614, 0.0
          %v2619 = vmax.f32 %v2615, 0.0
          %v2620 = vmax.f32 %v2616, 0.0
          %v2621 = vmax.f32 %v2617, 0.0
          %v2622 = vld [vmem:[%s9] sm:$0xff]
          %v2623 = vld [vmem:[%s9 + $0x8] sm:$0xff]
          %v2624 = vld [vmem:[%s9 + $0x10] sm:$0xff]
          %v2625 = vld [vmem:[%s9 + $0x18] sm:$0xff]
          %v2626 = vmul.f32 %v2618, %v2622
          %v2627 = vmul.f32 %v2619, %v2623
          %v2628 = vmul.f32 %v2620, %v2624
          %v2629 = vmul.f32 %v2621, %v2625
          %v2630 = vpack.c.bf16 %v2626, %v2626
          %v2631 = vpack.c.bf16 %v2627, %v2627
          %v2632 = vpack.c.bf16 %v2628, %v2628
          %v2633 = vpack.c.bf16 %v2629, %v2629
          %v2634 = vld [vmem:[#allocation15] sm:$0xf]
          %v2635 = vld [vmem:[#allocation15 + $0x4] sm:$0xf]
          %v2636 = vld [vmem:[#allocation15 + $0x8] sm:$0xf]
          %v2637 = vld [vmem:[#allocation15 + $0xc] sm:$0xf]
          %v2638 = vld [vmem:[#allocation15 + $0x10] sm:$0xf]
          %v2639 = vld [vmem:[#allocation15 + $0x14] sm:$0xf]
          %v2640 = vld [vmem:[#allocation15 + $0x18] sm:$0xf]
          %v2641 = vld [vmem:[#allocation15 + $0x1c] sm:$0xf]
          %v2642 = vld [vmem:[#allocation15 + $0x20] sm:$0xf]
          %v2643 = vld [vmem:[#allocation15 + $0x24] sm:$0xf]
          %v2644 = vld [vmem:[#allocation15 + $0x28] sm:$0xf]
          %v2645 = vld [vmem:[#allocation15 + $0x2c] sm:$0xf]
          %v2646 = vld [vmem:[#allocation15 + $0x30] sm:$0xf]
          %v2647 = vld [vmem:[#allocation15 + $0x34] sm:$0xf]
          %v2648 = vld [vmem:[#allocation15 + $0x38] sm:$0xf]
          %v2649 = vld [vmem:[#allocation15 + $0x3c] sm:$0xf]
          %v2650 = vld [vmem:[#allocation15 + $0x40] sm:$0xf]
          %v2651 = vld [vmem:[#allocation15 + $0x44] sm:$0xf]
          %v2652 = vld [vmem:[#allocation15 + $0x48] sm:$0xf]
          %v2653 = vld [vmem:[#allocation15 + $0x4c] sm:$0xf]
          %v2654 = vld [vmem:[#allocation15 + $0x50] sm:$0xf]
          %v2655 = vld [vmem:[#allocation15 + $0x54] sm:$0xf]
          %v2656 = vld [vmem:[#allocation15 + $0x58] sm:$0xf]
          %v2657 = vld [vmem:[#allocation15 + $0x5c] sm:$0xf]
          %v2658 = vld [vmem:[#allocation15 + $0x60] sm:$0xf]
          %v2659 = vld [vmem:[#allocation15 + $0x64] sm:$0xf]
          %v2660 = vld [vmem:[#allocation15 + $0x68] sm:$0xf]
          %v2661 = vld [vmem:[#allocation15 + $0x6c] sm:$0xf]
          %v2662 = vld [vmem:[#allocation15 + $0x70] sm:$0xf]
          %v2663 = vld [vmem:[#allocation15 + $0x74] sm:$0xf]
          %v2664 = vld [vmem:[#allocation15 + $0x78] sm:$0xf]
          %v2665 = vld [vmem:[#allocation15 + $0x7c] sm:$0xf]
          %v2666 = vld [vmem:[#allocation15 + $0x80] sm:$0xf]
          %v2667 = vld [vmem:[#allocation15 + $0x84] sm:$0xf]
          %v2668 = vld [vmem:[#allocation15 + $0x88] sm:$0xf]
          %v2669 = vld [vmem:[#allocation15 + $0x8c] sm:$0xf]
          %v2670 = vld [vmem:[#allocation15 + $0x90] sm:$0xf]
          %v2671 = vld [vmem:[#allocation15 + $0x94] sm:$0xf]
          %v2672 = vld [vmem:[#allocation15 + $0x98] sm:$0xf]
          %v2673 = vld [vmem:[#allocation15 + $0x9c] sm:$0xf]
          %v2674 = vld [vmem:[#allocation15 + $0xa0] sm:$0xf]
          %v2675 = vld [vmem:[#allocation15 + $0xa4] sm:$0xf]
          %v2676 = vld [vmem:[#allocation15 + $0xa8] sm:$0xf]
          %v2677 = vld [vmem:[#allocation15 + $0xac] sm:$0xf]
          %v2678 = vld [vmem:[#allocation15 + $0xb0] sm:$0xf]
          %v2679 = vld [vmem:[#allocation15 + $0xb4] sm:$0xf]
          %v2680 = vld [vmem:[#allocation15 + $0xb8] sm:$0xf]
          %v2681 = vld [vmem:[#allocation15 + $0xbc] sm:$0xf]
          %v2682 = vld [vmem:[#allocation15 + $0xc0] sm:$0xf]
          %v2683 = vld [vmem:[#allocation15 + $0xc4] sm:$0xf]
          %v2684 = vld [vmem:[#allocation15 + $0xc8] sm:$0xf]
          %v2685 = vld [vmem:[#allocation15 + $0xcc] sm:$0xf]
          %v2686 = vld [vmem:[#allocation15 + $0xd0] sm:$0xf]
          %v2687 = vld [vmem:[#allocation15 + $0xd4] sm:$0xf]
          %v2688 = vld [vmem:[#allocation15 + $0xd8] sm:$0xf]
          %v2689 = vld [vmem:[#allocation15 + $0xdc] sm:$0xf]
          %v2690 = vld [vmem:[#allocation15 + $0xe0] sm:$0xf]
          %v2691 = vld [vmem:[#allocation15 + $0xe4] sm:$0xf]
          %v2692 = vld [vmem:[#allocation15 + $0xe8] sm:$0xf]
          %v2693 = vld [vmem:[#allocation15 + $0xec] sm:$0xf]
          %v2694 = vld [vmem:[#allocation15 + $0xf0] sm:$0xf]
          %v2695 = vld [vmem:[#allocation15 + $0xf4] sm:$0xf]
          %v2696 = vld [vmem:[#allocation15 + $0xf8] sm:$0xf]
          %v2697 = vld [vmem:[#allocation15 + $0xfc] sm:$0xf]
          %v2698 = vld [vmem:[%s8] sm:$0x1]
          %v2700 = vlaneseq
          %v2701 = vshrl.u32 %v2700, 7
          %v2702 = vsub.s32 0, %v2701
          %v2703 = vrot.slane %v2698, %v2702
          %v2769 = vunpack.c.l.b16 %v2634
          %v2770 = vunpack.c.l.b16 %v2635
          %v2771 = vunpack.c.l.b16 %v2636
          %v2772 = vunpack.c.l.b16 %v2637
          %v2773 = vunpack.c.l.b16 %v2638
          %v2774 = vunpack.c.l.b16 %v2639
          %v2775 = vunpack.c.l.b16 %v2640
          %v2776 = vunpack.c.l.b16 %v2641
          %v2777 = vunpack.c.l.b16 %v2642
          %v2778 = vunpack.c.l.b16 %v2643
          %v2779 = vunpack.c.l.b16 %v2644
          %v2780 = vunpack.c.l.b16 %v2645
          %v2781 = vunpack.c.l.b16 %v2646
          %v2782 = vunpack.c.l.b16 %v2647
          %v2783 = vunpack.c.l.b16 %v2648
          %v2784 = vunpack.c.l.b16 %v2649
          %v2785 = vunpack.c.l.b16 %v2650
          %v2786 = vunpack.c.l.b16 %v2651
          %v2787 = vunpack.c.l.b16 %v2652
          %v2788 = vunpack.c.l.b16 %v2653
          %v2789 = vunpack.c.l.b16 %v2654
          %v2790 = vunpack.c.l.b16 %v2655
          %v2791 = vunpack.c.l.b16 %v2656
          %v2792 = vunpack.c.l.b16 %v2657
          %v2793 = vunpack.c.l.b16 %v2658
          %v2794 = vunpack.c.l.b16 %v2659
          %v2795 = vunpack.c.l.b16 %v2660
          %v2796 = vunpack.c.l.b16 %v2661
          %v2797 = vunpack.c.l.b16 %v2662
          %v2798 = vunpack.c.l.b16 %v2663
          %v2799 = vunpack.c.l.b16 %v2664
          %v2800 = vunpack.c.l.b16 %v2665
          %v2801 = vunpack.c.l.b16 %v2666
          %v2802 = vunpack.c.l.b16 %v2667
          %v2803 = vunpack.c.l.b16 %v2668
          %v2804 = vunpack.c.l.b16 %v2669
          %v2805 = vunpack.c.l.b16 %v2670
          %v2806 = vunpack.c.l.b16 %v2671
          %v2807 = vunpack.c.l.b16 %v2672
          %v2808 = vunpack.c.l.b16 %v2673
          %v2809 = vunpack.c.l.b16 %v2674
          %v2810 = vunpack.c.l.b16 %v2675
          %v2811 = vunpack.c.l.b16 %v2676
          %v2812 = vunpack.c.l.b16 %v2677
          %v2813 = vunpack.c.l.b16 %v2678
          %v2814 = vunpack.c.l.b16 %v2679
          %v2815 = vunpack.c.l.b16 %v2680
          %v2816 = vunpack.c.l.b16 %v2681
          %v2817 = vunpack.c.l.b16 %v2682
          %v2818 = vunpack.c.l.b16 %v2683
          %v2819 = vunpack.c.l.b16 %v2684
          %v2820 = vunpack.c.l.b16 %v2685
          %v2821 = vunpack.c.l.b16 %v2686
          %v2822 = vunpack.c.l.b16 %v2687
          %v2823 = vunpack.c.l.b16 %v2688
          %v2824 = vunpack.c.l.b16 %v2689
          %v2825 = vunpack.c.l.b16 %v2690
          %v2826 = vunpack.c.l.b16 %v2691
          %v2827 = vunpack.c.l.b16 %v2692
          %v2828 = vunpack.c.l.b16 %v2693
          %v2829 = vunpack.c.l.b16 %v2694
          %v2830 = vunpack.c.l.b16 %v2695
          %v2831 = vunpack.c.l.b16 %v2696
          %v2832 = vunpack.c.l.b16 %v2697
          %v2833 = vpack.c.b16 %v2770, %v2769
          %v2834 = vpack.c.b16 %v2772, %v2771
          %v2835 = vpack.c.b16 %v2774, %v2773
          %v2836 = vpack.c.b16 %v2776, %v2775
          %v2837 = vpack.c.b16 %v2778, %v2777
          %v2838 = vpack.c.b16 %v2780, %v2779
          %v2839 = vpack.c.b16 %v2782, %v2781
          %v2840 = vpack.c.b16 %v2784, %v2783
          %v2841 = vpack.c.b16 %v2786, %v2785
          %v2842 = vpack.c.b16 %v2788, %v2787
          %v2843 = vpack.c.b16 %v2790, %v2789
          %v2844 = vpack.c.b16 %v2792, %v2791
          %v2845 = vpack.c.b16 %v2794, %v2793
          %v2846 = vpack.c.b16 %v2796, %v2795
          %v2847 = vpack.c.b16 %v2798, %v2797
          %v2848 = vpack.c.b16 %v2800, %v2799
          %v2849 = vpack.c.b16 %v2802, %v2801
          %v2850 = vpack.c.b16 %v2804, %v2803
          %v2851 = vpack.c.b16 %v2806, %v2805
          %v2852 = vpack.c.b16 %v2808, %v2807
          %v2853 = vpack.c.b16 %v2810, %v2809
          %v2854 = vpack.c.b16 %v2812, %v2811
          %v2855 = vpack.c.b16 %v2814, %v2813
          %v2856 = vpack.c.b16 %v2816, %v2815
          %v2857 = vpack.c.b16 %v2818, %v2817
          %v2858 = vpack.c.b16 %v2820, %v2819
          %v2859 = vpack.c.b16 %v2822, %v2821
          %v2860 = vpack.c.b16 %v2824, %v2823
          %v2861 = vpack.c.b16 %v2826, %v2825
          %v2862 = vpack.c.b16 %v2828, %v2827
          %v2863 = vpack.c.b16 %v2830, %v2829
          %v2864 = vpack.c.b16 %v2832, %v2831
          %2897 = vmatprep.subr.bf16.mxu0 0
          %2898 = vmatpush1.bf16.msra.mxu0 %v2833
          %2899 = vmatprep.subr.bf16.mxu0 0
          %2900 = vmatpush1.bf16.msra.mxu0 %v2834
          %2901 = vmatprep.subr.bf16.mxu0 0
          %2902 = vmatpush1.bf16.msra.mxu0 %v2835
          %2903 = vmatprep.subr.bf16.mxu0 0
          %2904 = vmatpush1.bf16.msra.mxu0 %v2836
          %2905 = vmatprep.subr.bf16.mxu0 0
          %2906 = vmatpush1.bf16.msra.mxu0 %v2837
          %2907 = vmatprep.subr.bf16.mxu0 0
          %2908 = vmatpush1.bf16.msra.mxu0 %v2838
          %2909 = vmatprep.subr.bf16.mxu0 0
          %2910 = vmatpush1.bf16.msra.mxu0 %v2839
          %2911 = vmatprep.subr.bf16.mxu0 0
          %2912 = vmatpush1.bf16.msra.mxu0 %v2840
          %2913 = vmatprep.subr.bf16.mxu0 0
          %2914 = vmatpush1.bf16.msra.mxu0 %v2841
          %2915 = vmatprep.subr.bf16.mxu0 0
          %2916 = vmatpush1.bf16.msra.mxu0 %v2842
          %2917 = vmatprep.subr.bf16.mxu0 0
          %2918 = vmatpush1.bf16.msra.mxu0 %v2843
          %2919 = vmatprep.subr.bf16.mxu0 0
          %2920 = vmatpush1.bf16.msra.mxu0 %v2844
          %2921 = vmatprep.subr.bf16.mxu0 0
          %2922 = vmatpush1.bf16.msra.mxu0 %v2845
          %2923 = vmatprep.subr.bf16.mxu0 0
          %2924 = vmatpush1.bf16.msra.mxu0 %v2846
          %2925 = vmatprep.subr.bf16.mxu0 0
          %2926 = vmatpush1.bf16.msra.mxu0 %v2847
          %2927 = vmatprep.subr.bf16.mxu0 0
          %2928 = vmatpush1.bf16.msra.mxu0 %v2848
          %2929 = vmatprep.mubr.bf16.mxu0 %v2631
          %2930 = vmatmul.mubr.bf16.gmra.mrb[0].mxu0 %v2630
          %v2931 = vpop.f32.mrb[0].mxu0
          %v2932 = vadd.f32 %v2703, %v2931
          %v2933 = vpop.f32.mrb[0].mxu0
          %v2934 = vpop.f32.mrb[0].mxu0
          %v2935 = vpop.f32.mrb[0].mxu0
          %2936 = vdwg.mxu0
          %2937 = vmatprep.subr.bf16.mxu0 0
          %2938 = vmatpush1.bf16.msra.mxu0 %v2849
          %2939 = vmatprep.subr.bf16.mxu0 0
          %2940 = vmatpush1.bf16.msra.mxu0 %v2850
          %2941 = vmatprep.subr.bf16.mxu0 0
          %2942 = vmatpush1.bf16.msra.mxu0 %v2851
          %2943 = vmatprep.subr.bf16.mxu0 0
          %2944 = vmatpush1.bf16.msra.mxu0 %v2852
          %2945 = vmatprep.subr.bf16.mxu0 0
          %2946 = vmatpush1.bf16.msra.mxu0 %v2853
          %2947 = vmatprep.subr.bf16.mxu0 0
          %2948 = vmatpush1.bf16.msra.mxu0 %v2854
          %2949 = vmatprep.subr.bf16.mxu0 0
          %2950 = vmatpush1.bf16.msra.mxu0 %v2855
          %2951 = vmatprep.subr.bf16.mxu0 0
          %2952 = vmatpush1.bf16.msra.mxu0 %v2856
          %2953 = vmatprep.subr.bf16.mxu0 0
          %2954 = vmatpush1.bf16.msra.mxu0 %v2857
          %2955 = vmatprep.subr.bf16.mxu0 0
          %2956 = vmatpush1.bf16.msra.mxu0 %v2858
          %2957 = vmatprep.subr.bf16.mxu0 0
          %2958 = vmatpush1.bf16.msra.mxu0 %v2859
          %2959 = vmatprep.subr.bf16.mxu0 0
          %2960 = vmatpush1.bf16.msra.mxu0 %v2860
          %2961 = vmatprep.subr.bf16.mxu0 0
          %2962 = vmatpush1.bf16.msra.mxu0 %v2861
          %2963 = vmatprep.subr.bf16.mxu0 0
          %2964 = vmatpush1.bf16.msra.mxu0 %v2862
          %2965 = vmatprep.subr.bf16.mxu0 0
          %2966 = vmatpush1.bf16.msra.mxu0 %v2863
          %2967 = vmatprep.subr.bf16.mxu0 0
          %2968 = vmatpush1.bf16.msra.mxu0 %v2864
          %2969 = vmatprep.mubr.bf16.mxu0 %v2633
          %2970 = vmatmul.mubr.bf16.gmra.mrb[0].mxu0 %v2632
          %v2971 = vpop.f32.mrb[0].mxu0
          %v2972 = vadd.f32 %v2932, %v2971
          %v2973 = vpop.f32.mrb[0].mxu0
          %v2974 = vpop.f32.mrb[0].mxu0
          %v2975 = vpop.f32.mrb[0].mxu0
          %2976 = vdwg.mxu0
          %2977 = vst [vmem:[#allocation18] sm:$0xff] %v2972
        $region100: #{tpu_custom_call.1} parent=59 // pred_fallthru
          _
        // Predicated region
        $region101: #{tpu_custom_call.1} parent=59 // pred_check
          %p2978 = pneg %p267
        $region102: #{tpu_custom_call.1} parent=59 // pred_check_branch
          %2980 = sbr.rel (%p2978) target = $region104
        $region103: #{tpu_custom_call.1} parent=59 // pred_region
          %s2982 = ssub.s32 512, 512
          %2983 = vsyncadd [#allocation5], %s2982
          %s2985 = sshll.u32 [#allocation17], 4
          %s2986 = int_to_ptr.vmem [resolvable:$true] %s2985
          %2988 = dma.vmem_to_hbm [thread:$0]  %s2986, 512, %s10, [#allocation5]
        $region104: #{tpu_custom_call.1} parent=59 // pred_fallthru
          _
        // Predicated region
        $region105: #{tpu_custom_call.1} parent=59 // pred_check
          %p2989 = pneg %p288
        $region106: #{tpu_custom_call.1} parent=59 // pred_check_branch
          %2991 = sbr.rel (%p2989) target = $region108
        $region107: #{tpu_custom_call.1} parent=59 // pred_region
          %s2993 = ssub.s32 128, 128
          %2994 = vsyncadd [#allocation19], %s2993
          %s2996 = sshll.u32 [#allocation18], 4
          %s2997 = int_to_ptr.vmem [resolvable:$true] %s2996
          %2999 = dma.vmem_to_hbm [thread:$0]  %s2997, 128, %s11, [#allocation19]
        $region108: #{tpu_custom_call.1} parent=59 // pred_fallthru
          _
        // Predicated region
        $region109: #{tpu_custom_call.1} parent=59 // pred_check
          %p3000 = pneg %p267
        $region110: #{tpu_custom_call.1} parent=59 // pred_check_branch
          %3002 = sbr.rel (%p3000) target = $region112
        $region111: #{tpu_custom_call.1} parent=59 // pred_region
          %3003 = dma.done [#allocation5], 512
        $region112: #{tpu_custom_call.1} parent=59 // pred_fallthru
          _
        // Predicated region
        $region113: #{tpu_custom_call.1} parent=59 // pred_check
          %p3004 = pneg %p288
        $region114: #{tpu_custom_call.1} parent=59 // pred_check_branch
          %3006 = sbr.rel (%p3004) target = $region116
        $region115: #{tpu_custom_call.1} parent=59 // pred_region
          %3007 = dma.done [#allocation19], 128
        $region116: #{tpu_custom_call.1} parent=59 // pred_fallthru
          _
      $region60: #{tpu_custom_call.1} parent=5 // pred_fallthru
        _
      %p3008 = scmp.le.s32.totalorder 2, %s29
      // Predicated region
      $region117: #{tpu_custom_call.1} parent=5 // pred_check
        %p3009 = pneg %p3008
      $region118: #{tpu_custom_call.1} parent=5 // pred_check_branch
        %3011 = sbr.rel (%p3009) target = $region120
      $region119: #{tpu_custom_call.1} parent=5 // pred_region
        %s3012 = ssub.s32 %s29, 2
      $region120: #{tpu_custom_call.1} parent=5 // pred_fallthru
        _
    $region6: #{tpu_custom_call.1} parent=1 // loop_footer
      %s33 = sadd.s32 1, %s29
    $region7: #{tpu_custom_call.1} parent=1 // loop_footer_branch
      %28 = sbr.rel target = $region3
    $region8: #{tpu_custom_call.1} parent=1 // loop_exit
      _
    %3013 = vsyncpa [#allocation4], 1
    %s3014 = scalar_lea.sflag [#allocation4], 1
    %3015 = vsyncpa %s3014, 1
    %3016 = vsyncpa [#allocation7], 1
    %s3017 = scalar_lea.sflag [#allocation7], 1
    %3018 = vsyncpa %s3017, 1
    %3019 = vsyncpa [#allocation10], 1
    %3020 = vsyncpa [#allocation13], 1
    %3021 = vsyncpa [#allocation16], 1
    %3022 = vsyncpa [#allocation5], 1
    %s3023 = scalar_lea.sflag [#allocation5], 1
    %3024 = vsyncpa %s3023, 1
    %3025 = vsyncpa [#allocation19], 1

</llo_original>
